<compile_context>
chip_gen: v7x
topology: tpu7x:2x2x1
jax: 0.10.0
libtpu: 0.0.40
codegen_flags: <defaults>
</compile_context>

<pallas_src>
import jax
import jax.numpy as jnp
from jax.experimental import pallas as pl
from jax.experimental.pallas import tpu as pltpu


def _round_up(x, m):
    return ((x + m - 1) // m) * m


# ---------------------------------------------------------------------------
# Pallas kernel: one-hot embed + 4x (Linear+ReLU) + fused mean|log_std head
# with per-column clamp.  All weights/biases are VMEM-resident operands.
# ---------------------------------------------------------------------------
def _policy_kernel(cat_ref, xn_ref,
                   w1_ref, b1_ref, w2_ref, b2_ref, w3_ref, b3_ref,
                   w4_ref, b4_ref, wh_ref, bh_ref, lo_ref, hi_ref,
                   out_ref):
    cdt = w1_ref.dtype                       # MXU compute dtype (bf16)
    tb, k_in = xn_ref.shape

    # Fused embedding gather: each categorical column scatters a 1.0 into its
    # one-hot lane (index already offset by the wrapper).  Numeric features
    # already sit in lanes [0, NN) of xn (zero elsewhere), so a select builds
    # the full layer-1 input in one shot — no in-kernel concat.
    lane = jax.lax.broadcasted_iota(jnp.int32, (tb, k_in), 1)
    cat = cat_ref[...]                       # [TB, num_cat] int32
    hot = lane == cat[:, 0:1]
    for j in range(1, cat.shape[1]):
        hot = hot | (lane == cat[:, j:j + 1])
    x = jnp.where(hot, 1.0, xn_ref[...])     # f32 [TB, k_in]

    def linear_relu(v, w_ref, b_ref):
        y = jnp.dot(v.astype(cdt), w_ref[...],
                    preferred_element_type=jnp.float32) + b_ref[...]
        return jnp.maximum(y, 0.0)           # f32 bias add + ReLU

    h = linear_relu(x, w1_ref, b1_ref)       # layer 1 (embedding folded in)
    h = linear_relu(h, w2_ref, b2_ref)
    h = linear_relu(h, w3_ref, b3_ref)
    h = linear_relu(h, w4_ref, b4_ref)

    # Fused heads: one MXU pass -> [TB, 128] = [ mean | log_std | 0-pad ].
    head = jnp.dot(h.astype(cdt), wh_ref[...],
                   preferred_element_type=jnp.float32) + bh_ref[...]
    # Per-column clamp vectors: -inf/+inf on mean & pad lanes, min/max on
    # the log_std lanes — no iota, no select.
    head = jnp.minimum(jnp.maximum(head, lo_ref[...]), hi_ref[...])

    out_ref[...] = head.astype(out_ref.dtype)        # lane-dense store


# ---------------------------------------------------------------------------
# One-time parameter preparation: fold embedding tables into W1, fuse the two
# heads, zero-pad widths to 128 lanes, build the clamp vectors.
# ---------------------------------------------------------------------------
def prepare_params(params, emb_tables, *, num_numeric, num_actions,
                   log_std_min=-20.0, log_std_max=2.0,
                   compute_dtype=jnp.bfloat16):
    w1 = params["w1"]                        # [E + NN, hidden]
    hidden = w1.shape[1]
    num_cat = len(emb_tables)
    emb_dim = emb_tables[0].shape[1]
    E = num_cat * emb_dim
    NN = num_numeric
    assert w1.shape[0] == E + NN

    Hp = _round_up(hidden, 128)              # padded hidden width
    head_pad = _round_up(2 * num_actions, 128)
    vocab = [int(t.shape[0]) for t in emb_tables]
    k_in = NN + sum(vocab)                   # [ numeric | one-hot ] width

    # Fold tables into W1 (exact):  emb @ W1[:E] == onehot @ (blockdiag(T)@W1[:E]).
    w1_cat = jnp.concatenate(
        [emb_tables[j] @ w1[j * emb_dim:(j + 1) * emb_dim] for j in range(num_cat)],
        axis=0)                              # [sum(vocab), hidden]
    w1_full = jnp.concatenate([w1[E:], w1_cat], axis=0)      # [k_in, hidden]

    def pad2(a, rows, cols, dt):
        return jnp.pad(a, ((0, rows - a.shape[0]), (0, cols - a.shape[1]))).astype(dt)

    wh = jnp.concatenate([params["wm"], params["ws"]], axis=1)   # [hidden, 2A]
    bh = jnp.concatenate([params["bm"], params["bs"]], axis=1)   # [1, 2A]

    lo = jnp.full((1, head_pad), -jnp.inf, jnp.float32)
    hi = jnp.full((1, head_pad), jnp.inf, jnp.float32)
    lo = lo.at[0, num_actions:2 * num_actions].set(float(log_std_min))
    hi = hi.at[0, num_actions:2 * num_actions].set(float(log_std_max))

    prepared = dict(
        w1=pad2(w1_full, k_in, Hp, compute_dtype),
        b1=pad2(params["b1"], 1, Hp, jnp.float32),
        w2=pad2(params["w2"], Hp, Hp, compute_dtype),
        b2=pad2(params["b2"], 1, Hp, jnp.float32),
        w3=pad2(params["w3"], Hp, Hp, compute_dtype),
        b3=pad2(params["b3"], 1, Hp, jnp.float32),
        w4=pad2(params["w4"], Hp, Hp, compute_dtype),
        b4=pad2(params["b4"], 1, Hp, jnp.float32),
        wh=pad2(wh, Hp, head_pad, compute_dtype),
        bh=pad2(bh, 1, head_pad, jnp.float32),
        lo=lo, hi=hi,
    )
    # One-hot lane base offset per categorical column (numeric occupies [0, NN)).
    col_base = jnp.asarray([NN + sum(vocab[:j]) for j in range(num_cat)], jnp.int32)
    meta = dict(head_pad=head_pad, k_in=k_in, num_cat=num_cat,
                num_numeric=NN, num_actions=num_actions, col_base=col_base)
    return prepared, meta


# ---------------------------------------------------------------------------
# Batch tiling: maximize tile size (amortize ~0.35 µs/step overhead) but keep
# grid >= num_tensorcores so v7x's two TCs both get work.
# ---------------------------------------------------------------------------
def _tile_batch(B, *, block_b=1024, num_tensorcores=2, row_align=8):
    n_steps = pl.cdiv(B, block_b)
    if n_steps < num_tensorcores and B >= num_tensorcores * row_align:
        n_steps = num_tensorcores
    if n_steps == 1:
        return B, B, 1                       # single full-array tile, no padding
    TB = _round_up(pl.cdiv(B, n_steps), row_align)
    Bp = _round_up(B, TB)
    return TB, Bp, Bp // TB


# ---------------------------------------------------------------------------
# Forward pass (matches PolicyNetwork.forward): state -> (mean, log_std).
# ---------------------------------------------------------------------------
def policy_forward(state, prepared, meta, *, block_b=1024, num_tensorcores=2):
    num_cat, NN = meta["num_cat"], meta["num_numeric"]
    A, head_pad, k_in = meta["num_actions"], meta["head_pad"], meta["k_in"]

    B = state.shape[0]
    # Categorical indices (carried as floats, like PyTorch's .long()), shifted
    # to their one-hot lane base.  Numeric features placed in lanes [0, NN).
    cat_sh = state[:, :num_cat].astype(jnp.int32) + meta["col_base"][None, :]
    x_num = jnp.zeros((B, k_in), jnp.float32).at[:, :NN].set(state[:, num_cat:])

    TB, Bp, steps = _tile_batch(B, block_b=block_b, num_tensorcores=num_tensorcores)
    if Bp != B:
        cat_sh = jnp.pad(cat_sh, ((0, Bp - B), (0, 0)))
        x_num = jnp.pad(x_num, ((0, Bp - B), (0, 0)))

    order = ("w1", "b1", "w2", "b2", "w3", "b3", "w4", "b4", "wh", "bh", "lo", "hi")
    w_args = [prepared[k] for k in order]

    def resident(a):   # constant block index -> stays VMEM-resident across steps
        return pl.BlockSpec(a.shape, lambda i: (0, 0))

    out = pl.pallas_call(
        _policy_kernel,
        out_shape=jax.ShapeDtypeStruct((Bp, head_pad), jnp.float32),
        grid=(steps,),
        in_specs=[pl.BlockSpec((TB, num_cat), lambda i: (i, 0)),
                  pl.BlockSpec((TB, k_in), lambda i: (i, 0))]
                 + [resident(a) for a in w_args],
        out_specs=pl.BlockSpec((TB, head_pad), lambda i: (i, 0)),
        compiler_params=pltpu.CompilerParams(
            dimension_semantics=("parallel",),          # shard batch over TCs
            # Honest bound: resident weights (<200 KiB) + double-buffered
            # activations/output (<1.5 MiB at TB=1024) + compiler scratch.
            vmem_limit_bytes=8 * 1024 * 1024),
    )(cat_sh, x_num, *w_args)

    mean = out[:B, :A]
    log_std = out[:B, A:2 * A]
    return mean, log_std


# ---------------------------------------------------------------------------
# Pure-JAX f32 reference (mirrors the PyTorch forward) for correctness checks.
# ---------------------------------------------------------------------------
def embed_categoricals(cat_idx, tables):
    outs = [jnp.take(tbl, cat_idx[:, i], axis=0) for i, tbl in enumerate(tables)]
    return jnp.concatenate(outs, axis=1)


def policy_forward_ref(state, emb_tables, params, *, num_cat,
                       log_std_min=-20.0, log_std_max=2.0):
    cat = state[:, :num_cat].astype(jnp.int32)
    num = state[:, num_cat:]
    x = jnp.concatenate([embed_categoricals(cat, emb_tables), num], axis=1)
    h = jax.nn.relu(x @ params["w1"] + params["b1"])
    h = jax.nn.relu(h @ params["w2"] + params["b2"])
    h = jax.nn.relu(h @ params["w3"] + params["b3"])
    h = jax.nn.relu(h @ params["w4"] + params["b4"])
    mean = h @ params["wm"] + params["bm"]
    log_std = jnp.clip(h @ params["ws"] + params["bs"], log_std_min, log_std_max)
    return mean, log_std


# ---------------------------------------------------------------------------
# Deterministic parameter init (nn.Linear defaults + uniform head init).
# Weights are stored pre-transposed as [in_features, out_features].
# ---------------------------------------------------------------------------
def init_params(key, num_inputs, num_actions, hidden_size, init_w=0.003):
    keys = jax.random.split(key, 12)

    def linear(kw, kb, fan_in, fan_out):
        bound = 1.0 / jnp.sqrt(fan_in)
        w = jax.random.uniform(kw, (fan_in, fan_out), jnp.float32, -bound, bound)
        b = jax.random.uniform(kb, (1, fan_out), jnp.float32, -bound, bound)
        return w, b

    def head(kw, kb, fan_in, fan_out):
        w = jax.random.uniform(kw, (fan_in, fan_out), jnp.float32, -init_w, init_w)
        b = jax.random.uniform(kb, (1, fan_out), jnp.float32, -init_w, init_w)
        return w, b

    p = {}
    p["w1"], p["b1"] = linear(keys[0], keys[1], num_inputs, hidden_size)
    p["w2"], p["b2"] = linear(keys[2], keys[3], hidden_size, hidden_size)
    p["w3"], p["b3"] = linear(keys[4], keys[5], hidden_size, hidden_size)
    p["w4"], p["b4"] = linear(keys[6], keys[7], hidden_size, hidden_size)
    p["wm"], p["bm"] = head(keys[8], keys[9], hidden_size, num_actions)
    p["ws"], p["bs"] = head(keys[10], keys[11], hidden_size, num_actions)
    return p


if __name__ == "__main__":
    # Small, module-consistent shapes (batch big enough to exercise a 2-step grid).
    batch = 256
    num_cat = 3                       # len(embedding_layer.cat_cols)
    vocab_sizes = [5, 7, 4]
    emb_dim = 4                       # per-column embedding dim
    num_numeric = 4
    num_inputs = num_cat * emb_dim + num_numeric   # MLP input feature size = 16
    hidden_size = 32
    num_actions = 4

    root = jax.random.PRNGKey(0)
    k_params, k_emb, k_cat, k_num = jax.random.split(root, 4)

    params = init_params(k_params, num_inputs, num_actions, hidden_size)
    emb_keys = jax.random.split(k_emb, num_cat)
    emb_tables = [jax.random.normal(emb_keys[i], (vocab_sizes[i], emb_dim), jnp.float32)
                  for i in range(num_cat)]

    prepared, meta = prepare_params(params, emb_tables,
                                    num_numeric=num_numeric,
                                    num_actions=num_actions,
                                    compute_dtype=jnp.bfloat16)

    # state: first num_cat columns are categorical indices carried as floats
    # (like the PyTorch code which calls .long()), the rest are numeric features.
    cat_idx = jnp.stack(
        [jax.random.randint(jax.random.fold_in(k_cat, i), (batch,), 0, vocab_sizes[i])
         for i in range(num_cat)], axis=1).astype(jnp.float32)
    num_feats = jax.random.normal(k_num, (batch, num_numeric), jnp.float32)
    state = jnp.concatenate([cat_idx, num_feats], axis=1)   # [B, num_cat + num_numeric]

    mean, log_std = policy_forward(state, prepared, meta)
    jax.block_until_ready((mean, log_std))

    assert mean.shape == (batch, num_actions)
    assert log_std.shape == (batch, num_actions)
    assert bool(jnp.all(log_std >= -20.0)) and bool(jnp.all(log_std <= 2.0))

    # Compare against the pure-JAX f32 reference (bf16 MXU path => loose atol).
    mean_ref, log_std_ref = policy_forward_ref(state, emb_tables, params,
                                               num_cat=num_cat)
    assert bool(jnp.max(jnp.abs(mean - mean_ref)) < 2e-2)
    assert bool(jnp.max(jnp.abs(log_std - log_std_ref)) < 2e-2)

    # Also exercise the small-batch, single-tile path (grid=(1,), no padding).
    mean_s, log_std_s = policy_forward(state[:5], prepared, meta)
    jax.block_until_ready((mean_s, log_std_s))
    assert bool(jnp.max(jnp.abs(mean_s - mean_ref[:5])) < 2e-2)
    assert bool(jnp.max(jnp.abs(log_std_s - log_std_ref[:5])) < 2e-2)

    print("KERNEL_OK")
</pallas_src>

<mosaic_0001>
module attributes {stable_mosaic.version = 11 : i64} {
  func.func @_policy_kernel(%arg0: i32, %arg1: memref<128x3xi32, #tpu.memory_space<vmem>>, %arg2: memref<128x20xf32, #tpu.memory_space<vmem>>, %arg3: memref<20x128xbf16, #tpu.memory_space<vmem>>, %arg4: memref<1x128xf32, #tpu.memory_space<vmem>>, %arg5: memref<128x128xbf16, #tpu.memory_space<vmem>>, %arg6: memref<1x128xf32, #tpu.memory_space<vmem>>, %arg7: memref<128x128xbf16, #tpu.memory_space<vmem>>, %arg8: memref<1x128xf32, #tpu.memory_space<vmem>>, %arg9: memref<128x128xbf16, #tpu.memory_space<vmem>>, %arg10: memref<1x128xf32, #tpu.memory_space<vmem>>, %arg11: memref<128x128xbf16, #tpu.memory_space<vmem>>, %arg12: memref<1x128xf32, #tpu.memory_space<vmem>>, %arg13: memref<1x128xf32, #tpu.memory_space<vmem>>, %arg14: memref<1x128xf32, #tpu.memory_space<vmem>>, %arg15: memref<128x128xf32, #tpu.memory_space<vmem>>) attributes {dimension_semantics = [#tpu.dimension_semantics<parallel>], iteration_bounds = array<i64: 2>, scalar_prefetch = 0 : i64, scratch_operands = 0 : i64, tpu.core_type = #tpu.core_type<tc>, window_params = [{transform_indices = @transform_0, window_bounds = array<i64: 128, 3>}, {transform_indices = @transform_1, window_bounds = array<i64: 128, 20>}, {pipeline_mode = #tpu.pipeline_mode<synchronous>, transform_indices = @transform_2, window_bounds = array<i64: 20, 128>}, {pipeline_mode = #tpu.pipeline_mode<synchronous>, transform_indices = @transform_3, window_bounds = array<i64: 1, 128>}, {pipeline_mode = #tpu.pipeline_mode<synchronous>, transform_indices = @transform_4, window_bounds = array<i64: 128, 128>}, {pipeline_mode = #tpu.pipeline_mode<synchronous>, transform_indices = @transform_5, window_bounds = array<i64: 1, 128>}, {pipeline_mode = #tpu.pipeline_mode<synchronous>, transform_indices = @transform_6, window_bounds = array<i64: 128, 128>}, {pipeline_mode = #tpu.pipeline_mode<synchronous>, transform_indices = @transform_7, window_bounds = array<i64: 1, 128>}, {pipeline_mode = #tpu.pipeline_mode<synchronous>, transform_indices = @transform_8, window_bounds = array<i64: 128, 128>}, {pipeline_mode = #tpu.pipeline_mode<synchronous>, transform_indices = @transform_9, window_bounds = array<i64: 1, 128>}, {pipeline_mode = #tpu.pipeline_mode<synchronous>, transform_indices = @transform_10, window_bounds = array<i64: 128, 128>}, {pipeline_mode = #tpu.pipeline_mode<synchronous>, transform_indices = @transform_11, window_bounds = array<i64: 1, 128>}, {pipeline_mode = #tpu.pipeline_mode<synchronous>, transform_indices = @transform_12, window_bounds = array<i64: 1, 128>}, {pipeline_mode = #tpu.pipeline_mode<synchronous>, transform_indices = @transform_13, window_bounds = array<i64: 1, 128>}, {transform_indices = @transform_14, window_bounds = array<i64: 128, 128>}]} {
    %0 = tpu.iota {dimensions = array<i32: 1>} : vector<128x20xi32>
    %c0 = arith.constant 0 : index
    %c0_0 = arith.constant 0 : index
    %1 = vector.load %arg1[%c0, %c0_0] : memref<128x3xi32, #tpu.memory_space<vmem>>, vector<128x3xi32>
    %2 = vector.extract_strided_slice %1 {offsets = [0, 0], sizes = [128, 1], strides = [1, 1]} : vector<128x3xi32> to vector<128x1xi32>
    %3 = vector.broadcast %2 : vector<128x1xi32> to vector<128x20xi32>
    %4 = arith.cmpi eq, %0, %3 : vector<128x20xi32>
    %5 = vector.extract_strided_slice %1 {offsets = [0, 1], sizes = [128, 1], strides = [1, 1]} : vector<128x3xi32> to vector<128x1xi32>
    %6 = vector.broadcast %5 : vector<128x1xi32> to vector<128x20xi32>
    %7 = arith.cmpi eq, %0, %6 : vector<128x20xi32>
    %8 = arith.ori %4, %7 : vector<128x20xi1>
    %9 = vector.extract_strided_slice %1 {offsets = [0, 2], sizes = [128, 1], strides = [1, 1]} : vector<128x3xi32> to vector<128x1xi32>
    %10 = vector.broadcast %9 : vector<128x1xi32> to vector<128x20xi32>
    %11 = arith.cmpi eq, %0, %10 : vector<128x20xi32>
    %12 = arith.ori %8, %11 : vector<128x20xi1>
    %c0_1 = arith.constant 0 : index
    %c0_2 = arith.constant 0 : index
    %13 = vector.load %arg2[%c0_1, %c0_2] : memref<128x20xf32, #tpu.memory_space<vmem>>, vector<128x20xf32>
    %cst = arith.constant 1.000000e+00 : f32
    %14 = vector.broadcast %cst : f32 to vector<128x20xf32>
    %15 = arith.select %12, %14, %13 : vector<128x20xi1>, vector<128x20xf32>
    %16 = arith.truncf %15 : vector<128x20xf32> to vector<128x20xbf16>
    %c0_3 = arith.constant 0 : index
    %c0_4 = arith.constant 0 : index
    %17 = vector.load %arg3[%c0_3, %c0_4] : memref<20x128xbf16, #tpu.memory_space<vmem>>, vector<20x128xbf16>
    %cst_5 = arith.constant dense<0.000000e+00> : vector<128x128xf32>
    %18 = tpu.matmul %16, %17, %cst_5 {dimension_numbers = #tpu.dot_dimension_numbers<[1], [0], [0], [1], [0, 0, 1, 1], [], []>} : vector<128x20xbf16>, vector<20x128xbf16>, vector<128x128xf32> -> vector<128x128xf32>
    %c0_6 = arith.constant 0 : index
    %c0_7 = arith.constant 0 : index
    %19 = vector.load %arg4[%c0_6, %c0_7] : memref<1x128xf32, #tpu.memory_space<vmem>>, vector<1x128xf32>
    %20 = vector.broadcast %19 : vector<1x128xf32> to vector<128x128xf32>
    %21 = arith.addf %18, %20 : vector<128x128xf32>
    %cst_8 = arith.constant 0.000000e+00 : f32
    %22 = vector.broadcast %cst_8 : f32 to vector<128x128xf32>
    %23 = arith.maximumf %21, %22 : vector<128x128xf32>
    %24 = arith.truncf %23 : vector<128x128xf32> to vector<128x128xbf16>
    %c0_9 = arith.constant 0 : index
    %c0_10 = arith.constant 0 : index
    %25 = vector.load %arg5[%c0_9, %c0_10] : memref<128x128xbf16, #tpu.memory_space<vmem>>, vector<128x128xbf16>
    %cst_11 = arith.constant dense<0.000000e+00> : vector<128x128xf32>
    %26 = tpu.matmul %24, %25, %cst_11 {dimension_numbers = #tpu.dot_dimension_numbers<[1], [0], [0], [1], [0, 0, 1, 1], [], []>} : vector<128x128xbf16>, vector<128x128xbf16>, vector<128x128xf32> -> vector<128x128xf32>
    %c0_12 = arith.constant 0 : index
    %c0_13 = arith.constant 0 : index
    %27 = vector.load %arg6[%c0_12, %c0_13] : memref<1x128xf32, #tpu.memory_space<vmem>>, vector<1x128xf32>
    %28 = vector.broadcast %27 : vector<1x128xf32> to vector<128x128xf32>
    %29 = arith.addf %26, %28 : vector<128x128xf32>
    %cst_14 = arith.constant 0.000000e+00 : f32
    %30 = vector.broadcast %cst_14 : f32 to vector<128x128xf32>
    %31 = arith.maximumf %29, %30 : vector<128x128xf32>
    %32 = arith.truncf %31 : vector<128x128xf32> to vector<128x128xbf16>
    %c0_15 = arith.constant 0 : index
    %c0_16 = arith.constant 0 : index
    %33 = vector.load %arg7[%c0_15, %c0_16] : memref<128x128xbf16, #tpu.memory_space<vmem>>, vector<128x128xbf16>
    %cst_17 = arith.constant dense<0.000000e+00> : vector<128x128xf32>
    %34 = tpu.matmul %32, %33, %cst_17 {dimension_numbers = #tpu.dot_dimension_numbers<[1], [0], [0], [1], [0, 0, 1, 1], [], []>} : vector<128x128xbf16>, vector<128x128xbf16>, vector<128x128xf32> -> vector<128x128xf32>
    %c0_18 = arith.constant 0 : index
    %c0_19 = arith.constant 0 : index
    %35 = vector.load %arg8[%c0_18, %c0_19] : memref<1x128xf32, #tpu.memory_space<vmem>>, vector<1x128xf32>
    %36 = vector.broadcast %35 : vector<1x128xf32> to vector<128x128xf32>
    %37 = arith.addf %34, %36 : vector<128x128xf32>
    %cst_20 = arith.constant 0.000000e+00 : f32
    %38 = vector.broadcast %cst_20 : f32 to vector<128x128xf32>
    %39 = arith.maximumf %37, %38 : vector<128x128xf32>
    %40 = arith.truncf %39 : vector<128x128xf32> to vector<128x128xbf16>
    %c0_21 = arith.constant 0 : index
    %c0_22 = arith.constant 0 : index
    %41 = vector.load %arg9[%c0_21, %c0_22] : memref<128x128xbf16, #tpu.memory_space<vmem>>, vector<128x128xbf16>
    %cst_23 = arith.constant dense<0.000000e+00> : vector<128x128xf32>
    %42 = tpu.matmul %40, %41, %cst_23 {dimension_numbers = #tpu.dot_dimension_numbers<[1], [0], [0], [1], [0, 0, 1, 1], [], []>} : vector<128x128xbf16>, vector<128x128xbf16>, vector<128x128xf32> -> vector<128x128xf32>
    %c0_24 = arith.constant 0 : index
    %c0_25 = arith.constant 0 : index
    %43 = vector.load %arg10[%c0_24, %c0_25] : memref<1x128xf32, #tpu.memory_space<vmem>>, vector<1x128xf32>
    %44 = vector.broadcast %43 : vector<1x128xf32> to vector<128x128xf32>
    %45 = arith.addf %42, %44 : vector<128x128xf32>
    %cst_26 = arith.constant 0.000000e+00 : f32
    %46 = vector.broadcast %cst_26 : f32 to vector<128x128xf32>
    %47 = arith.maximumf %45, %46 : vector<128x128xf32>
    %48 = arith.truncf %47 : vector<128x128xf32> to vector<128x128xbf16>
    %c0_27 = arith.constant 0 : index
    %c0_28 = arith.constant 0 : index
    %49 = vector.load %arg11[%c0_27, %c0_28] : memref<128x128xbf16, #tpu.memory_space<vmem>>, vector<128x128xbf16>
    %cst_29 = arith.constant dense<0.000000e+00> : vector<128x128xf32>
    %50 = tpu.matmul %48, %49, %cst_29 {dimension_numbers = #tpu.dot_dimension_numbers<[1], [0], [0], [1], [0, 0, 1, 1], [], []>} : vector<128x128xbf16>, vector<128x128xbf16>, vector<128x128xf32> -> vector<128x128xf32>
    %c0_30 = arith.constant 0 : index
    %c0_31 = arith.constant 0 : index
    %51 = vector.load %arg12[%c0_30, %c0_31] : memref<1x128xf32, #tpu.memory_space<vmem>>, vector<1x128xf32>
    %52 = vector.broadcast %51 : vector<1x128xf32> to vector<128x128xf32>
    %53 = arith.addf %50, %52 : vector<128x128xf32>
    %c0_32 = arith.constant 0 : index
    %c0_33 = arith.constant 0 : index
    %54 = vector.load %arg13[%c0_32, %c0_33] : memref<1x128xf32, #tpu.memory_space<vmem>>, vector<1x128xf32>
    %55 = vector.broadcast %54 : vector<1x128xf32> to vector<128x128xf32>
    %56 = arith.maximumf %53, %55 : vector<128x128xf32>
    %c0_34 = arith.constant 0 : index
    %c0_35 = arith.constant 0 : index
    %57 = vector.load %arg14[%c0_34, %c0_35] : memref<1x128xf32, #tpu.memory_space<vmem>>, vector<1x128xf32>
    %58 = vector.broadcast %57 : vector<1x128xf32> to vector<128x128xf32>
    %59 = arith.minimumf %56, %58 : vector<128x128xf32>
    %c0_36 = arith.constant 0 : index
    %c0_37 = arith.constant 0 : index
    %60 = vector.load %arg15[%c0_36, %c0_37] : memref<128x128xf32, #tpu.memory_space<vmem>>, vector<128x128xf32>
    tpu.vector_store %arg15[%c0_36, %c0_37], %59 {strides = array<i32>} : memref<128x128xf32, #tpu.memory_space<vmem>>, vector<128x128xf32>,
    return
  }
  func.func @transform_0(%arg0: i32) -> (i32, i32) {
    %c0_i32 = arith.constant 0 : i32
    %c0_i32_0 = arith.constant 0 : i32
    return %arg0, %c0_i32 : i32, i32
  }
  func.func @transform_1(%arg0: i32) -> (i32, i32) {
    %c0_i32 = arith.constant 0 : i32
    %c0_i32_0 = arith.constant 0 : i32
    return %arg0, %c0_i32 : i32, i32
  }
  func.func @transform_2(%arg0: i32) -> (i32, i32) {
    %c0_i32 = arith.constant 0 : i32
    %c0_i32_0 = arith.constant 0 : i32
    %c0_i32_1 = arith.constant 0 : i32
    return %c0_i32, %c0_i32_0 : i32, i32
  }
  func.func @transform_3(%arg0: i32) -> (i32, i32) {
    %c0_i32 = arith.constant 0 : i32
    %c0_i32_0 = arith.constant 0 : i32
    %c0_i32_1 = arith.constant 0 : i32
    return %c0_i32, %c0_i32_0 : i32, i32
  }
  func.func @transform_4(%arg0: i32) -> (i32, i32) {
    %c0_i32 = arith.constant 0 : i32
    %c0_i32_0 = arith.constant 0 : i32
    %c0_i32_1 = arith.constant 0 : i32
    return %c0_i32, %c0_i32_0 : i32, i32
  }
  func.func @transform_5(%arg0: i32) -> (i32, i32) {
    %c0_i32 = arith.constant 0 : i32
    %c0_i32_0 = arith.constant 0 : i32
    %c0_i32_1 = arith.constant 0 : i32
    return %c0_i32, %c0_i32_0 : i32, i32
  }
  func.func @transform_6(%arg0: i32) -> (i32, i32) {
    %c0_i32 = arith.constant 0 : i32
    %c0_i32_0 = arith.constant 0 : i32
    %c0_i32_1 = arith.constant 0 : i32
    return %c0_i32, %c0_i32_0 : i32, i32
  }
  func.func @transform_7(%arg0: i32) -> (i32, i32) {
    %c0_i32 = arith.constant 0 : i32
    %c0_i32_0 = arith.constant 0 : i32
    %c0_i32_1 = arith.constant 0 : i32
    return %c0_i32, %c0_i32_0 : i32, i32
  }
  func.func @transform_8(%arg0: i32) -> (i32, i32) {
    %c0_i32 = arith.constant 0 : i32
    %c0_i32_0 = arith.constant 0 : i32
    %c0_i32_1 = arith.constant 0 : i32
    return %c0_i32, %c0_i32_0 : i32, i32
  }
  func.func @transform_9(%arg0: i32) -> (i32, i32) {
    %c0_i32 = arith.constant 0 : i32
    %c0_i32_0 = arith.constant 0 : i32
    %c0_i32_1 = arith.constant 0 : i32
    return %c0_i32, %c0_i32_0 : i32, i32
  }
  func.func @transform_10(%arg0: i32) -> (i32, i32) {
    %c0_i32 = arith.constant 0 : i32
    %c0_i32_0 = arith.constant 0 : i32
    %c0_i32_1 = arith.constant 0 : i32
    return %c0_i32, %c0_i32_0 : i32, i32
  }
  func.func @transform_11(%arg0: i32) -> (i32, i32) {
    %c0_i32 = arith.constant 0 : i32
    %c0_i32_0 = arith.constant 0 : i32
    %c0_i32_1 = arith.constant 0 : i32
    return %c0_i32, %c0_i32_0 : i32, i32
  }
  func.func @transform_12(%arg0: i32) -> (i32, i32) {
    %c0_i32 = arith.constant 0 : i32
    %c0_i32_0 = arith.constant 0 : i32
    %c0_i32_1 = arith.constant 0 : i32
    return %c0_i32, %c0_i32_0 : i32, i32
  }
  func.func @transform_13(%arg0: i32) -> (i32, i32) {
    %c0_i32 = arith.constant 0 : i32
    %c0_i32_0 = arith.constant 0 : i32
    %c0_i32_1 = arith.constant 0 : i32
    return %c0_i32, %c0_i32_0 : i32, i32
  }
  func.func @transform_14(%arg0: i32) -> (i32, i32) {
    %c0_i32 = arith.constant 0 : i32
    %c0_i32_0 = arith.constant 0 : i32
    return %arg0, %c0_i32 : i32, i32
  }
}

</mosaic_0001>

<llo_original>
// kernel: tpu_custom_call.1
$region0: #{tpu_custom_call.1}
  #allocation0 [shape = 'u32[]', space=smem, size = 0x4, offset = 0x4, fixed_abs, tag = 'smem constant byte address 0x4 - core index']
  #allocation1 [shape = 'u32[144,128]{1,0:T(1,128)}', space=vmem, size = 0x12000, scoped, tag = 'internal scratch']
  %s0 = inlined_call_operand.vmem [shape: s32[256,3], index: 0, kind: input, shape index: {}]
  %s1 = inlined_call_operand.vmem [shape: f32[256,20], index: 1, kind: input, shape index: {}]
  %s2 = inlined_call_operand.vmem [shape: bf16[20,128], index: 2, kind: input, shape index: {}]
  %s3 = inlined_call_operand.vmem [shape: f32[1,128], index: 3, kind: input, shape index: {}]
  %s4 = inlined_call_operand.vmem [shape: bf16[128,128], index: 4, kind: input, shape index: {}]
  %s5 = inlined_call_operand.vmem [shape: f32[1,128], index: 5, kind: input, shape index: {}]
  %s6 = inlined_call_operand.vmem [shape: bf16[128,128], index: 6, kind: input, shape index: {}]
  %s7 = inlined_call_operand.vmem [shape: f32[1,128], index: 7, kind: input, shape index: {}]
  %s8 = inlined_call_operand.vmem [shape: bf16[128,128], index: 8, kind: input, shape index: {}]
  %s9 = inlined_call_operand.vmem [shape: f32[1,128], index: 9, kind: input, shape index: {}]
  %s10 = inlined_call_operand.vmem [shape: bf16[128,128], index: 10, kind: input, shape index: {}]
  %s11 = inlined_call_operand.vmem [shape: f32[1,128], index: 11, kind: input, shape index: {}]
  %s12 = inlined_call_operand.vmem [shape: f32[1,128], index: 12, kind: input, shape index: {}]
  %s13 = inlined_call_operand.vmem [shape: f32[1,128], index: 13, kind: input, shape index: {}]
  %s14 = inlined_call_operand.hbm [shape: f32[256,128], index: 14, kind: output, shape index: {}]
  %s15 = sld [smem:[#allocation0]]
  $region89: #{tpu_custom_call.1} parent=0
    _
  %s17 = ssub.s32 1, %s15
  %s18 = scalar_select 0, %s17, %s15
  $region1: #{tpu_custom_call.1} parent=0
    #allocation2 [shape = 'u8[131072]{0}', space=vmem, size = 0x20000, scoped, tag = 'output window, operand 0']
    #allocation3 [shape = 's32[2]{0}', space=sflag, size = 0x8, scoped, tag = 'scoped memory for tpu_custom_call.1']
    %19 = vsyncpa [#allocation3], 0
    %s20 = scalar_lea.sflag [#allocation3], 1
    %21 = vsyncpa %s20, 0
    loop: start=0, step=1, limit=4
    $region2: #{tpu_custom_call.1} parent=1 // loop_pre_header
      _
    $region3: #{tpu_custom_call.1} parent=1 // loop_header
      %s23 = sphi 0, %s27
      %p24 = scmp.ge.s32.totalorder %s23, 4
      %s33 = sphi 0, %s35
      %s36 = sphi 0, %s33
      %s37 = sphi 0, %s36
      %s53 = sphi 0, %s37
      %s59 = sphi 0, %s61
      %s62 = sphi 0, %s59
      %s63 = sphi 0, %s62
      %s79 = sphi 0, %s63
      %s83 = sphi 0, %s83
      %s85 = sphi 0, %s83
      %s86 = sphi 0, %s85
      %s100 = sphi 0, %s86
      %s104 = sphi 0, %s104
      %s106 = sphi 0, %s104
      %s107 = sphi 0, %s106
      %s121 = sphi 0, %s107
      %s125 = sphi 0, %s125
      %s127 = sphi 0, %s125
      %s128 = sphi 0, %s127
      %s142 = sphi 0, %s128
      %s146 = sphi 0, %s146
      %s148 = sphi 0, %s146
      %s149 = sphi 0, %s148
      %s163 = sphi 0, %s149
      %s167 = sphi 0, %s167
      %s169 = sphi 0, %s167
      %s170 = sphi 0, %s169
      %s184 = sphi 0, %s170
      %s188 = sphi 0, %s188
      %s190 = sphi 0, %s188
      %s191 = sphi 0, %s190
      %s205 = sphi 0, %s191
      %s209 = sphi 0, %s209
      %s211 = sphi 0, %s209
      %s212 = sphi 0, %s211
      %s226 = sphi 0, %s212
      %s230 = sphi 0, %s230
      %s232 = sphi 0, %s230
      %s233 = sphi 0, %s232
      %s247 = sphi 0, %s233
      %s251 = sphi 0, %s251
      %s253 = sphi 0, %s251
      %s254 = sphi 0, %s253
      %s268 = sphi 0, %s254
      %s272 = sphi 0, %s272
      %s274 = sphi 0, %s272
      %s275 = sphi 0, %s274
      %s289 = sphi 0, %s275
      %s293 = sphi 0, %s293
      %s295 = sphi 0, %s293
      %s296 = sphi 0, %s295
      %s310 = sphi 0, %s296
      %s314 = sphi 0, %s314
      %s316 = sphi 0, %s314
      %s317 = sphi 0, %s316
      %s331 = sphi 0, %s317
      %s337 = sphi 0, %s339
      %s340 = sphi 0, %s337
      %s341 = sphi 0, %s340
      %s357 = sphi 0, %s341
    $region4: #{tpu_custom_call.1} parent=1 // loop_header_branch
      %26 = sbr.rel (%p24) target = $region8
    $region5: #{tpu_custom_call.1} parent=1 // loop_body
      %s28 = ssub.s32 %s23, 1
      %s29 = ssub.s32 %s23, 2
      %s30 = sadd.s32 %s23, 1
      %s31 = ssub.s32 %s23, %s30
      %p32 = scmp.eq.s32.totalorder %s31, 0
      %s34 = sadd.s32 %s33, 1
      %s35 = scalar_select %p32, %s33, %s34
      %p38 = pneg %p32
      %p39 = scmp.eq.s32.totalorder %s23, 1
      %p40 = por %p38, %p39
      %p41 = scmp.ne.s32.totalorder %s33, %s36
      %p42 = scmp.eq.s32.totalorder %s23, 0
      %p43 = por %p41, %p42
      %p44 = scmp.ne.s32.totalorder %s33, %s36
      %p45 = scmp.eq.s32.totalorder %s28, 1
      %p46 = por %p44, %p45
      %p47 = scmp.ne.s32.totalorder %s36, %s37
      %p48 = scmp.eq.s32.totalorder %s28, 0
      %p49 = por %p47, %p48
      %p50 = scmp.ne.s32.totalorder %s36, %s37
      %p51 = scmp.eq.s32.totalorder %s29, 1
      %p52 = por %p50, %p51
      %p54 = scmp.ne.s32.totalorder %s37, %s53
      %p55 = scmp.eq.s32.totalorder %s29, 0
      %p56 = por %p54, %p55
      %s57 = ssub.s32 %s23, %s30
      %p58 = scmp.eq.s32.totalorder %s57, 0
      %s60 = sadd.s32 %s59, 1
      %s61 = scalar_select %p58, %s59, %s60
      %p64 = pneg %p58
      %p65 = scmp.eq.s32.totalorder %s23, 1
      %p66 = por %p64, %p65
      %p67 = scmp.ne.s32.totalorder %s59, %s62
      %p68 = scmp.eq.s32.totalorder %s23, 0
      %p69 = por %p67, %p68
      %p70 = scmp.ne.s32.totalorder %s59, %s62
      %p71 = scmp.eq.s32.totalorder %s28, 1
      %p72 = por %p70, %p71
      %p73 = scmp.ne.s32.totalorder %s62, %s63
      %p74 = scmp.eq.s32.totalorder %s28, 0
      %p75 = por %p73, %p74
      %p76 = scmp.ne.s32.totalorder %s62, %s63
      %p77 = scmp.eq.s32.totalorder %s29, 1
      %p78 = por %p76, %p77
      %p80 = scmp.ne.s32.totalorder %s63, %s79
      %p81 = scmp.eq.s32.totalorder %s29, 0
      %p82 = por %p80, %p81
      %s84 = sadd.s32 %s83, 1
      %p87 = scmp.eq.s32.totalorder %s23, 1
      %p88 = scmp.ne.s32.totalorder %s83, %s85
      %p89 = scmp.eq.s32.totalorder %s23, 0
      %p90 = por %p88, %p89
      %p91 = scmp.ne.s32.totalorder %s83, %s85
      %p92 = scmp.eq.s32.totalorder %s28, 1
      %p93 = por %p91, %p92
      %p94 = scmp.ne.s32.totalorder %s85, %s86
      %p95 = scmp.eq.s32.totalorder %s28, 0
      %p96 = por %p94, %p95
      %p97 = scmp.ne.s32.totalorder %s85, %s86
      %p98 = scmp.eq.s32.totalorder %s29, 1
      %p99 = por %p97, %p98
      %p101 = scmp.ne.s32.totalorder %s86, %s100
      %p102 = scmp.eq.s32.totalorder %s29, 0
      %p103 = por %p101, %p102
      %s105 = sadd.s32 %s104, 1
      %p108 = scmp.eq.s32.totalorder %s23, 1
      %p109 = scmp.ne.s32.totalorder %s104, %s106
      %p110 = scmp.eq.s32.totalorder %s23, 0
      %p111 = por %p109, %p110
      %p112 = scmp.ne.s32.totalorder %s104, %s106
      %p113 = scmp.eq.s32.totalorder %s28, 1
      %p114 = por %p112, %p113
      %p115 = scmp.ne.s32.totalorder %s106, %s107
      %p116 = scmp.eq.s32.totalorder %s28, 0
      %p117 = por %p115, %p116
      %p118 = scmp.ne.s32.totalorder %s106, %s107
      %p119 = scmp.eq.s32.totalorder %s29, 1
      %p120 = por %p118, %p119
      %p122 = scmp.ne.s32.totalorder %s107, %s121
      %p123 = scmp.eq.s32.totalorder %s29, 0
      %p124 = por %p122, %p123
      %s126 = sadd.s32 %s125, 1
      %p129 = scmp.eq.s32.totalorder %s23, 1
      %p130 = scmp.ne.s32.totalorder %s125, %s127
      %p131 = scmp.eq.s32.totalorder %s23, 0
      %p132 = por %p130, %p131
      %p133 = scmp.ne.s32.totalorder %s125, %s127
      %p134 = scmp.eq.s32.totalorder %s28, 1
      %p135 = por %p133, %p134
      %p136 = scmp.ne.s32.totalorder %s127, %s128
      %p137 = scmp.eq.s32.totalorder %s28, 0
      %p138 = por %p136, %p137
      %p139 = scmp.ne.s32.totalorder %s127, %s128
      %p140 = scmp.eq.s32.totalorder %s29, 1
      %p141 = por %p139, %p140
      %p143 = scmp.ne.s32.totalorder %s128, %s142
      %p144 = scmp.eq.s32.totalorder %s29, 0
      %p145 = por %p143, %p144
      %s147 = sadd.s32 %s146, 1
      %p150 = scmp.eq.s32.totalorder %s23, 1
      %p151 = scmp.ne.s32.totalorder %s146, %s148
      %p152 = scmp.eq.s32.totalorder %s23, 0
      %p153 = por %p151, %p152
      %p154 = scmp.ne.s32.totalorder %s146, %s148
      %p155 = scmp.eq.s32.totalorder %s28, 1
      %p156 = por %p154, %p155
      %p157 = scmp.ne.s32.totalorder %s148, %s149
      %p158 = scmp.eq.s32.totalorder %s28, 0
      %p159 = por %p157, %p158
      %p160 = scmp.ne.s32.totalorder %s148, %s149
      %p161 = scmp.eq.s32.totalorder %s29, 1
      %p162 = por %p160, %p161
      %p164 = scmp.ne.s32.totalorder %s149, %s163
      %p165 = scmp.eq.s32.totalorder %s29, 0
      %p166 = por %p164, %p165
      %s168 = sadd.s32 %s167, 1
      %p171 = scmp.eq.s32.totalorder %s23, 1
      %p172 = scmp.ne.s32.totalorder %s167, %s169
      %p173 = scmp.eq.s32.totalorder %s23, 0
      %p174 = por %p172, %p173
      %p175 = scmp.ne.s32.totalorder %s167, %s169
      %p176 = scmp.eq.s32.totalorder %s28, 1
      %p177 = por %p175, %p176
      %p178 = scmp.ne.s32.totalorder %s169, %s170
      %p179 = scmp.eq.s32.totalorder %s28, 0
      %p180 = por %p178, %p179
      %p181 = scmp.ne.s32.totalorder %s169, %s170
      %p182 = scmp.eq.s32.totalorder %s29, 1
      %p183 = por %p181, %p182
      %p185 = scmp.ne.s32.totalorder %s170, %s184
      %p186 = scmp.eq.s32.totalorder %s29, 0
      %p187 = por %p185, %p186
      %s189 = sadd.s32 %s188, 1
      %p192 = scmp.eq.s32.totalorder %s23, 1
      %p193 = scmp.ne.s32.totalorder %s188, %s190
      %p194 = scmp.eq.s32.totalorder %s23, 0
      %p195 = por %p193, %p194
      %p196 = scmp.ne.s32.totalorder %s188, %s190
      %p197 = scmp.eq.s32.totalorder %s28, 1
      %p198 = por %p196, %p197
      %p199 = scmp.ne.s32.totalorder %s190, %s191
      %p200 = scmp.eq.s32.totalorder %s28, 0
      %p201 = por %p199, %p200
      %p202 = scmp.ne.s32.totalorder %s190, %s191
      %p203 = scmp.eq.s32.totalorder %s29, 1
      %p204 = por %p202, %p203
      %p206 = scmp.ne.s32.totalorder %s191, %s205
      %p207 = scmp.eq.s32.totalorder %s29, 0
      %p208 = por %p206, %p207
      %s210 = sadd.s32 %s209, 1
      %p213 = scmp.eq.s32.totalorder %s23, 1
      %p214 = scmp.ne.s32.totalorder %s209, %s211
      %p215 = scmp.eq.s32.totalorder %s23, 0
      %p216 = por %p214, %p215
      %p217 = scmp.ne.s32.totalorder %s209, %s211
      %p218 = scmp.eq.s32.totalorder %s28, 1
      %p219 = por %p217, %p218
      %p220 = scmp.ne.s32.totalorder %s211, %s212
      %p221 = scmp.eq.s32.totalorder %s28, 0
      %p222 = por %p220, %p221
      %p223 = scmp.ne.s32.totalorder %s211, %s212
      %p224 = scmp.eq.s32.totalorder %s29, 1
      %p225 = por %p223, %p224
      %p227 = scmp.ne.s32.totalorder %s212, %s226
      %p228 = scmp.eq.s32.totalorder %s29, 0
      %p229 = por %p227, %p228
      %s231 = sadd.s32 %s230, 1
      %p234 = scmp.eq.s32.totalorder %s23, 1
      %p235 = scmp.ne.s32.totalorder %s230, %s232
      %p236 = scmp.eq.s32.totalorder %s23, 0
      %p237 = por %p235, %p236
      %p238 = scmp.ne.s32.totalorder %s230, %s232
      %p239 = scmp.eq.s32.totalorder %s28, 1
      %p240 = por %p238, %p239
      %p241 = scmp.ne.s32.totalorder %s232, %s233
      %p242 = scmp.eq.s32.totalorder %s28, 0
      %p243 = por %p241, %p242
      %p244 = scmp.ne.s32.totalorder %s232, %s233
      %p245 = scmp.eq.s32.totalorder %s29, 1
      %p246 = por %p244, %p245
      %p248 = scmp.ne.s32.totalorder %s233, %s247
      %p249 = scmp.eq.s32.totalorder %s29, 0
      %p250 = por %p248, %p249
      %s252 = sadd.s32 %s251, 1
      %p255 = scmp.eq.s32.totalorder %s23, 1
      %p256 = scmp.ne.s32.totalorder %s251, %s253
      %p257 = scmp.eq.s32.totalorder %s23, 0
      %p258 = por %p256, %p257
      %p259 = scmp.ne.s32.totalorder %s251, %s253
      %p260 = scmp.eq.s32.totalorder %s28, 1
      %p261 = por %p259, %p260
      %p262 = scmp.ne.s32.totalorder %s253, %s254
      %p263 = scmp.eq.s32.totalorder %s28, 0
      %p264 = por %p262, %p263
      %p265 = scmp.ne.s32.totalorder %s253, %s254
      %p266 = scmp.eq.s32.totalorder %s29, 1
      %p267 = por %p265, %p266
      %p269 = scmp.ne.s32.totalorder %s254, %s268
      %p270 = scmp.eq.s32.totalorder %s29, 0
      %p271 = por %p269, %p270
      %s273 = sadd.s32 %s272, 1
      %p276 = scmp.eq.s32.totalorder %s23, 1
      %p277 = scmp.ne.s32.totalorder %s272, %s274
      %p278 = scmp.eq.s32.totalorder %s23, 0
      %p279 = por %p277, %p278
      %p280 = scmp.ne.s32.totalorder %s272, %s274
      %p281 = scmp.eq.s32.totalorder %s28, 1
      %p282 = por %p280, %p281
      %p283 = scmp.ne.s32.totalorder %s274, %s275
      %p284 = scmp.eq.s32.totalorder %s28, 0
      %p285 = por %p283, %p284
      %p286 = scmp.ne.s32.totalorder %s274, %s275
      %p287 = scmp.eq.s32.totalorder %s29, 1
      %p288 = por %p286, %p287
      %p290 = scmp.ne.s32.totalorder %s275, %s289
      %p291 = scmp.eq.s32.totalorder %s29, 0
      %p292 = por %p290, %p291
      %s294 = sadd.s32 %s293, 1
      %p297 = scmp.eq.s32.totalorder %s23, 1
      %p298 = scmp.ne.s32.totalorder %s293, %s295
      %p299 = scmp.eq.s32.totalorder %s23, 0
      %p300 = por %p298, %p299
      %p301 = scmp.ne.s32.totalorder %s293, %s295
      %p302 = scmp.eq.s32.totalorder %s28, 1
      %p303 = por %p301, %p302
      %p304 = scmp.ne.s32.totalorder %s295, %s296
      %p305 = scmp.eq.s32.totalorder %s28, 0
      %p306 = por %p304, %p305
      %p307 = scmp.ne.s32.totalorder %s295, %s296
      %p308 = scmp.eq.s32.totalorder %s29, 1
      %p309 = por %p307, %p308
      %p311 = scmp.ne.s32.totalorder %s296, %s310
      %p312 = scmp.eq.s32.totalorder %s29, 0
      %p313 = por %p311, %p312
      %s315 = sadd.s32 %s314, 1
      %p318 = scmp.eq.s32.totalorder %s23, 1
      %p319 = scmp.ne.s32.totalorder %s314, %s316
      %p320 = scmp.eq.s32.totalorder %s23, 0
      %p321 = por %p319, %p320
      %p322 = scmp.ne.s32.totalorder %s314, %s316
      %p323 = scmp.eq.s32.totalorder %s28, 1
      %p324 = por %p322, %p323
      %p325 = scmp.ne.s32.totalorder %s316, %s317
      %p326 = scmp.eq.s32.totalorder %s28, 0
      %p327 = por %p325, %p326
      %p328 = scmp.ne.s32.totalorder %s316, %s317
      %p329 = scmp.eq.s32.totalorder %s29, 1
      %p330 = por %p328, %p329
      %p332 = scmp.ne.s32.totalorder %s317, %s331
      %p333 = scmp.eq.s32.totalorder %s29, 0
      %p334 = por %p332, %p333
      %s335 = ssub.s32 %s23, %s30
      %p336 = scmp.eq.s32.totalorder %s335, 0
      %s338 = sadd.s32 %s337, 1
      %s339 = scalar_select %p336, %s337, %s338
      %p342 = pneg %p336
      %p343 = scmp.eq.s32.totalorder %s23, 1
      %p344 = por %p342, %p343
      %p345 = scmp.ne.s32.totalorder %s337, %s340
      %p346 = scmp.eq.s32.totalorder %s23, 0
      %p347 = por %p345, %p346
      %p348 = scmp.ne.s32.totalorder %s337, %s340
      %p349 = scmp.eq.s32.totalorder %s28, 1
      %p350 = por %p348, %p349
      %p351 = scmp.ne.s32.totalorder %s340, %s341
      %p352 = scmp.eq.s32.totalorder %s28, 0
      %p353 = por %p351, %p352
      %p354 = scmp.ne.s32.totalorder %s340, %s341
      %p355 = scmp.eq.s32.totalorder %s29, 1
      %p356 = por %p354, %p355
      %p358 = scmp.ne.s32.totalorder %s341, %s357
      %p359 = scmp.eq.s32.totalorder %s29, 0
      %p360 = por %p358, %p359
      %p361 = scmp.le.s32.totalorder 1, %s23
      %p362 = scmp.lt.s32.totalorder %s23, 3
      %p363 = pnand %p361, %p362
      %p364 = pneg %p363
      // Predicated region
      $region9: #{tpu_custom_call.1} parent=5 // pred_check
        _
      $region10: #{tpu_custom_call.1} parent=5 // pred_check_branch
        %366 = sbr.rel (%p363) target = $region12
      $region11: #{tpu_custom_call.1} parent=5 // pred_region
        %s367 = ssub.s32 %s23, 1
        // Predicated region
        $region13: #{tpu_custom_call.1} parent=11 // pred_check
          %p368 = pneg %p96
        $region14: #{tpu_custom_call.1} parent=11 // pred_check_branch
          %370 = sbr.rel (%p368) target = $region16
        $region15: #{tpu_custom_call.1} parent=11 // pred_region
          _
        $region16: #{tpu_custom_call.1} parent=11 // pred_fallthru
          _
        // Predicated region
        $region17: #{tpu_custom_call.1} parent=11 // pred_check
          %p371 = pneg %p117
        $region18: #{tpu_custom_call.1} parent=11 // pred_check_branch
          %373 = sbr.rel (%p371) target = $region20
        $region19: #{tpu_custom_call.1} parent=11 // pred_region
          _
        $region20: #{tpu_custom_call.1} parent=11 // pred_fallthru
          _
        // Predicated region
        $region21: #{tpu_custom_call.1} parent=11 // pred_check
          %p374 = pneg %p138
        $region22: #{tpu_custom_call.1} parent=11 // pred_check_branch
          %376 = sbr.rel (%p374) target = $region24
        $region23: #{tpu_custom_call.1} parent=11 // pred_region
          _
        $region24: #{tpu_custom_call.1} parent=11 // pred_fallthru
          _
        // Predicated region
        $region25: #{tpu_custom_call.1} parent=11 // pred_check
          %p377 = pneg %p159
        $region26: #{tpu_custom_call.1} parent=11 // pred_check_branch
          %379 = sbr.rel (%p377) target = $region28
        $region27: #{tpu_custom_call.1} parent=11 // pred_region
          _
        $region28: #{tpu_custom_call.1} parent=11 // pred_fallthru
          _
        // Predicated region
        $region29: #{tpu_custom_call.1} parent=11 // pred_check
          %p380 = pneg %p180
        $region30: #{tpu_custom_call.1} parent=11 // pred_check_branch
          %382 = sbr.rel (%p380) target = $region32
        $region31: #{tpu_custom_call.1} parent=11 // pred_region
          _
        $region32: #{tpu_custom_call.1} parent=11 // pred_fallthru
          _
        // Predicated region
        $region33: #{tpu_custom_call.1} parent=11 // pred_check
          %p383 = pneg %p201
        $region34: #{tpu_custom_call.1} parent=11 // pred_check_branch
          %385 = sbr.rel (%p383) target = $region36
        $region35: #{tpu_custom_call.1} parent=11 // pred_region
          _
        $region36: #{tpu_custom_call.1} parent=11 // pred_fallthru
          _
        // Predicated region
        $region37: #{tpu_custom_call.1} parent=11 // pred_check
          %p386 = pneg %p222
        $region38: #{tpu_custom_call.1} parent=11 // pred_check_branch
          %388 = sbr.rel (%p386) target = $region40
        $region39: #{tpu_custom_call.1} parent=11 // pred_region
          _
        $region40: #{tpu_custom_call.1} parent=11 // pred_fallthru
          _
        // Predicated region
        $region41: #{tpu_custom_call.1} parent=11 // pred_check
          %p389 = pneg %p243
        $region42: #{tpu_custom_call.1} parent=11 // pred_check_branch
          %391 = sbr.rel (%p389) target = $region44
        $region43: #{tpu_custom_call.1} parent=11 // pred_region
          _
        $region44: #{tpu_custom_call.1} parent=11 // pred_fallthru
          _
        // Predicated region
        $region45: #{tpu_custom_call.1} parent=11 // pred_check
          %p392 = pneg %p264
        $region46: #{tpu_custom_call.1} parent=11 // pred_check_branch
          %394 = sbr.rel (%p392) target = $region48
        $region47: #{tpu_custom_call.1} parent=11 // pred_region
          _
        $region48: #{tpu_custom_call.1} parent=11 // pred_fallthru
          _
        // Predicated region
        $region49: #{tpu_custom_call.1} parent=11 // pred_check
          %p395 = pneg %p285
        $region50: #{tpu_custom_call.1} parent=11 // pred_check_branch
          %397 = sbr.rel (%p395) target = $region52
        $region51: #{tpu_custom_call.1} parent=11 // pred_region
          _
        $region52: #{tpu_custom_call.1} parent=11 // pred_fallthru
          _
        // Predicated region
        $region53: #{tpu_custom_call.1} parent=11 // pred_check
          %p398 = pneg %p306
        $region54: #{tpu_custom_call.1} parent=11 // pred_check_branch
          %400 = sbr.rel (%p398) target = $region56
        $region55: #{tpu_custom_call.1} parent=11 // pred_region
          _
        $region56: #{tpu_custom_call.1} parent=11 // pred_fallthru
          _
        // Predicated region
        $region57: #{tpu_custom_call.1} parent=11 // pred_check
          %p401 = pneg %p327
        $region58: #{tpu_custom_call.1} parent=11 // pred_check_branch
          %403 = sbr.rel (%p401) target = $region60
        $region59: #{tpu_custom_call.1} parent=11 // pred_region
          _
        $region60: #{tpu_custom_call.1} parent=11 // pred_fallthru
          _
      $region12: #{tpu_custom_call.1} parent=5 // pred_fallthru
        _
      %p404 = scmp.lt.s32.totalorder %s23, 2
      // Predicated region
      $region61: #{tpu_custom_call.1} parent=5 // pred_check
        %p405 = pneg %p404
      $region62: #{tpu_custom_call.1} parent=5 // pred_check_branch
        %407 = sbr.rel (%p405) target = $region64
      $region63: #{tpu_custom_call.1} parent=5 // pred_region
        // Predicated region
        $region65: #{tpu_custom_call.1} parent=63 // pred_check
          %p408 = pneg %p43
        $region66: #{tpu_custom_call.1} parent=63 // pred_check_branch
          %410 = sbr.rel (%p408) target = $region68
        $region67: #{tpu_custom_call.1} parent=63 // pred_region
          %s411 = smul.u32 16, %s23
          %p412 = scmp.lt.s32.totalorder %s411, 31
          %s413 = scalar_select %p412, %s411, 31
          %s414 = smul.addr %s413, 8
          %s415 = scalar_lea.vmem %s0, %s414
          %s416 = smul.u32 16, %s23
        $region68: #{tpu_custom_call.1} parent=63 // pred_fallthru
          _
        // Predicated region
        $region69: #{tpu_custom_call.1} parent=63 // pred_check
          %p417 = pneg %p69
        $region70: #{tpu_custom_call.1} parent=63 // pred_check_branch
          %419 = sbr.rel (%p417) target = $region72
        $region71: #{tpu_custom_call.1} parent=63 // pred_region
          %s420 = smul.u32 16, %s23
          %p421 = scmp.lt.s32.totalorder %s420, 31
          %s422 = scalar_select %p421, %s420, 31
          %s423 = smul.addr %s422, 8
          %s424 = scalar_lea.vmem %s1, %s423
          %s425 = smul.u32 16, %s23
        $region72: #{tpu_custom_call.1} parent=63 // pred_fallthru
          _
      $region64: #{tpu_custom_call.1} parent=5 // pred_fallthru
        _
      %p426 = scmp.le.s32.totalorder 1, %s23
      %p427 = scmp.lt.s32.totalorder %s23, 3
      %p428 = pnand %p426, %p427
      %p429 = pneg %p428
      // Predicated region
      $region73: #{tpu_custom_call.1} parent=5 // pred_check
        _
      $region74: #{tpu_custom_call.1} parent=5 // pred_check_branch
        %431 = sbr.rel (%p428) target = $region76
      $region75: #{tpu_custom_call.1} parent=5 // pred_region
        %s432 = ssub.s32 %s23, 1
        %s433 = smul.u32 16, %s28
        %p434 = scmp.lt.s32.totalorder %s433, 31
        %s435 = scalar_select %p434, %s433, 31
        %s436 = smul.addr %s435, 8
        %s437 = scalar_lea.vmem %s0, %s436
        %p438 = pneg %p49
        %p439 = pneg %p46
        %s440 = smul.u32 16, %s28
        %p441 = scmp.lt.s32.totalorder %s440, 31
        %s442 = scalar_select %p441, %s440, 31
        %s443 = smul.addr %s442, 8
        %s444 = scalar_lea.vmem %s1, %s443
        %p445 = pneg %p75
        %p446 = pneg %p72
        %p447 = pneg %p96
        %p448 = pneg %p93
        %p449 = pneg %p117
        %p450 = pneg %p114
        %p451 = pneg %p138
        %p452 = pneg %p135
        %p453 = pneg %p159
        %p454 = pneg %p156
        %p455 = pneg %p180
        %p456 = pneg %p177
        %p457 = pneg %p201
        %p458 = pneg %p198
        %p459 = pneg %p222
        %p460 = pneg %p219
        %p461 = pneg %p243
        %p462 = pneg %p240
        %p463 = pneg %p264
        %p464 = pneg %p261
        %p465 = pneg %p285
        %p466 = pneg %p282
        %p467 = pneg %p306
        %p468 = pneg %p303
        %p469 = pneg %p327
        %p470 = pneg %p324
        %p471 = pneg %p353
        %p472 = pneg %p350
        %s473 = sand.u32 %s340, 1
        %s474 = scalar_lea.sflag [#allocation3], %s473
        %s475 = sand.u32 %s340, 1
        %s476 = smul.addr %s475, 128
        %s477 = scalar_lea.vmem [#allocation2], %s476
        %s478 = smul.u32 16, %s28
        %p479 = scmp.lt.s32.totalorder %s478, 31
        %s480 = scalar_select %p479, %s478, 31
        %s481 = smul.addr %s480, 8
        %s482 = scalar_lea.vmem %s0, %s481
        %s483 = smul.u32 16, %s28
        %s484 = smul.u32 16, %s28
        %p485 = scmp.lt.s32.totalorder %s484, 31
        %s486 = scalar_select %p485, %s484, 31
        %s487 = smul.addr %s486, 8
        %s488 = scalar_lea.vmem %s1, %s487
        %s489 = smul.u32 16, %s28
        %s490 = smul.u32 16, %s28
        %v492 = vlaneseq
        %v493 = vand.u32 %v492, 127
        %v494 = vld [vmem:[%s482] sm:$0xff]
        %v495 = vld [vmem:[%s482 + $0x8] sm:$0xff]
        %v496 = vld [vmem:[%s482 + $0x10] sm:$0xff]
        %v497 = vld [vmem:[%s482 + $0x18] sm:$0xff]
        %v498 = vld [vmem:[%s482 + $0x20] sm:$0xff]
        %v499 = vld [vmem:[%s482 + $0x28] sm:$0xff]
        %v500 = vld [vmem:[%s482 + $0x30] sm:$0xff]
        %v501 = vld [vmem:[%s482 + $0x38] sm:$0xff]
        %v502 = vld [vmem:[%s482 + $0x40] sm:$0xff]
        %v503 = vld [vmem:[%s482 + $0x48] sm:$0xff]
        %v504 = vld [vmem:[%s482 + $0x50] sm:$0xff]
        %v505 = vld [vmem:[%s482 + $0x58] sm:$0xff]
        %v506 = vld [vmem:[%s482 + $0x60] sm:$0xff]
        %v507 = vld [vmem:[%s482 + $0x68] sm:$0xff]
        %v508 = vld [vmem:[%s482 + $0x70] sm:$0xff]
        %v509 = vld [vmem:[%s482 + $0x78] sm:$0xff]
        %510 = vset.pattern.permute.xlu0 0
        %511 = vperm.xlu0 %510, %v494
        %v512 = vpop.permute.xlu0 %511
        %513 = vset.pattern.permute.xlu0 0
        %514 = vperm.xlu0 %513, %v495
        %v515 = vpop.permute.xlu0 %514
        %516 = vset.pattern.permute.xlu0 0
        %517 = vperm.xlu0 %516, %v496
        %v518 = vpop.permute.xlu0 %517
        %519 = vset.pattern.permute.xlu0 0
        %520 = vperm.xlu0 %519, %v497
        %v521 = vpop.permute.xlu0 %520
        %522 = vset.pattern.permute.xlu0 0
        %523 = vperm.xlu0 %522, %v498
        %v524 = vpop.permute.xlu0 %523
        %525 = vset.pattern.permute.xlu0 0
        %526 = vperm.xlu0 %525, %v499
        %v527 = vpop.permute.xlu0 %526
        %528 = vset.pattern.permute.xlu0 0
        %529 = vperm.xlu0 %528, %v500
        %v530 = vpop.permute.xlu0 %529
        %531 = vset.pattern.permute.xlu0 0
        %532 = vperm.xlu0 %531, %v501
        %v533 = vpop.permute.xlu0 %532
        %534 = vset.pattern.permute.xlu0 0
        %535 = vperm.xlu0 %534, %v502
        %v536 = vpop.permute.xlu0 %535
        %537 = vset.pattern.permute.xlu0 0
        %538 = vperm.xlu0 %537, %v503
        %v539 = vpop.permute.xlu0 %538
        %540 = vset.pattern.permute.xlu0 0
        %541 = vperm.xlu0 %540, %v504
        %v542 = vpop.permute.xlu0 %541
        %543 = vset.pattern.permute.xlu0 0
        %544 = vperm.xlu0 %543, %v505
        %v545 = vpop.permute.xlu0 %544
        %546 = vset.pattern.permute.xlu0 0
        %547 = vperm.xlu0 %546, %v506
        %v548 = vpop.permute.xlu0 %547
        %549 = vset.pattern.permute.xlu0 0
        %550 = vperm.xlu0 %549, %v507
        %v551 = vpop.permute.xlu0 %550
        %552 = vset.pattern.permute.xlu0 0
        %553 = vperm.xlu0 %552, %v508
        %v554 = vpop.permute.xlu0 %553
        %555 = vset.pattern.permute.xlu0 0
        %556 = vperm.xlu0 %555, %v509
        %v557 = vpop.permute.xlu0 %556
        %vm558 = vcmp.eq.s32.totalorder %v493, %v512
        %vm559 = vcmp.eq.s32.totalorder %v493, %v515
        %vm560 = vcmp.eq.s32.totalorder %v493, %v518
        %vm561 = vcmp.eq.s32.totalorder %v493, %v521
        %vm562 = vcmp.eq.s32.totalorder %v493, %v524
        %vm563 = vcmp.eq.s32.totalorder %v493, %v527
        %vm564 = vcmp.eq.s32.totalorder %v493, %v530
        %vm565 = vcmp.eq.s32.totalorder %v493, %v533
        %vm566 = vcmp.eq.s32.totalorder %v493, %v536
        %vm567 = vcmp.eq.s32.totalorder %v493, %v539
        %vm568 = vcmp.eq.s32.totalorder %v493, %v542
        %vm569 = vcmp.eq.s32.totalorder %v493, %v545
        %vm570 = vcmp.eq.s32.totalorder %v493, %v548
        %vm571 = vcmp.eq.s32.totalorder %v493, %v551
        %vm572 = vcmp.eq.s32.totalorder %v493, %v554
        %vm573 = vcmp.eq.s32.totalorder %v493, %v557
        %574 = vset.pattern.permute.xlu0 1
        %575 = vperm.xlu0 %574, %v494
        %v576 = vpop.permute.xlu0 %575
        %577 = vset.pattern.permute.xlu0 1
        %578 = vperm.xlu0 %577, %v495
        %v579 = vpop.permute.xlu0 %578
        %580 = vset.pattern.permute.xlu0 1
        %581 = vperm.xlu0 %580, %v496
        %v582 = vpop.permute.xlu0 %581
        %583 = vset.pattern.permute.xlu0 1
        %584 = vperm.xlu0 %583, %v497
        %v585 = vpop.permute.xlu0 %584
        %586 = vset.pattern.permute.xlu0 1
        %587 = vperm.xlu0 %586, %v498
        %v588 = vpop.permute.xlu0 %587
        %589 = vset.pattern.permute.xlu0 1
        %590 = vperm.xlu0 %589, %v499
        %v591 = vpop.permute.xlu0 %590
        %592 = vset.pattern.permute.xlu0 1
        %593 = vperm.xlu0 %592, %v500
        %v594 = vpop.permute.xlu0 %593
        %595 = vset.pattern.permute.xlu0 1
        %596 = vperm.xlu0 %595, %v501
        %v597 = vpop.permute.xlu0 %596
        %598 = vset.pattern.permute.xlu0 1
        %599 = vperm.xlu0 %598, %v502
        %v600 = vpop.permute.xlu0 %599
        %601 = vset.pattern.permute.xlu0 1
        %602 = vperm.xlu0 %601, %v503
        %v603 = vpop.permute.xlu0 %602
        %604 = vset.pattern.permute.xlu0 1
        %605 = vperm.xlu0 %604, %v504
        %v606 = vpop.permute.xlu0 %605
        %607 = vset.pattern.permute.xlu0 1
        %608 = vperm.xlu0 %607, %v505
        %v609 = vpop.permute.xlu0 %608
        %610 = vset.pattern.permute.xlu0 1
        %611 = vperm.xlu0 %610, %v506
        %v612 = vpop.permute.xlu0 %611
        %613 = vset.pattern.permute.xlu0 1
        %614 = vperm.xlu0 %613, %v507
        %v615 = vpop.permute.xlu0 %614
        %616 = vset.pattern.permute.xlu0 1
        %617 = vperm.xlu0 %616, %v508
        %v618 = vpop.permute.xlu0 %617
        %619 = vset.pattern.permute.xlu0 1
        %620 = vperm.xlu0 %619, %v509
        %v621 = vpop.permute.xlu0 %620
        %vm622 = vcmp.eq.s32.totalorder %v493, %v576
        %vm623 = vcmp.eq.s32.totalorder %v493, %v579
        %vm624 = vcmp.eq.s32.totalorder %v493, %v582
        %vm625 = vcmp.eq.s32.totalorder %v493, %v585
        %vm626 = vcmp.eq.s32.totalorder %v493, %v588
        %vm627 = vcmp.eq.s32.totalorder %v493, %v591
        %vm628 = vcmp.eq.s32.totalorder %v493, %v594
        %vm629 = vcmp.eq.s32.totalorder %v493, %v597
        %vm630 = vcmp.eq.s32.totalorder %v493, %v600
        %vm631 = vcmp.eq.s32.totalorder %v493, %v603
        %vm632 = vcmp.eq.s32.totalorder %v493, %v606
        %vm633 = vcmp.eq.s32.totalorder %v493, %v609
        %vm634 = vcmp.eq.s32.totalorder %v493, %v612
        %vm635 = vcmp.eq.s32.totalorder %v493, %v615
        %vm636 = vcmp.eq.s32.totalorder %v493, %v618
        %vm637 = vcmp.eq.s32.totalorder %v493, %v621
        %vm638 = vmor %vm558, %vm622
        %vm639 = vmor %vm559, %vm623
        %vm640 = vmor %vm560, %vm624
        %vm641 = vmor %vm561, %vm625
        %vm642 = vmor %vm562, %vm626
        %vm643 = vmor %vm563, %vm627
        %vm644 = vmor %vm564, %vm628
        %vm645 = vmor %vm565, %vm629
        %vm646 = vmor %vm566, %vm630
        %vm647 = vmor %vm567, %vm631
        %vm648 = vmor %vm568, %vm632
        %vm649 = vmor %vm569, %vm633
        %vm650 = vmor %vm570, %vm634
        %vm651 = vmor %vm571, %vm635
        %vm652 = vmor %vm572, %vm636
        %vm653 = vmor %vm573, %vm637
        %654 = vset.pattern.permute.xlu0 2
        %655 = vperm.xlu0 %654, %v494
        %v656 = vpop.permute.xlu0 %655
        %657 = vset.pattern.permute.xlu0 2
        %658 = vperm.xlu0 %657, %v495
        %v659 = vpop.permute.xlu0 %658
        %660 = vset.pattern.permute.xlu0 2
        %661 = vperm.xlu0 %660, %v496
        %v662 = vpop.permute.xlu0 %661
        %663 = vset.pattern.permute.xlu0 2
        %664 = vperm.xlu0 %663, %v497
        %v665 = vpop.permute.xlu0 %664
        %666 = vset.pattern.permute.xlu0 2
        %667 = vperm.xlu0 %666, %v498
        %v668 = vpop.permute.xlu0 %667
        %669 = vset.pattern.permute.xlu0 2
        %670 = vperm.xlu0 %669, %v499
        %v671 = vpop.permute.xlu0 %670
        %672 = vset.pattern.permute.xlu0 2
        %673 = vperm.xlu0 %672, %v500
        %v674 = vpop.permute.xlu0 %673
        %675 = vset.pattern.permute.xlu0 2
        %676 = vperm.xlu0 %675, %v501
        %v677 = vpop.permute.xlu0 %676
        %678 = vset.pattern.permute.xlu0 2
        %679 = vperm.xlu0 %678, %v502
        %v680 = vpop.permute.xlu0 %679
        %681 = vset.pattern.permute.xlu0 2
        %682 = vperm.xlu0 %681, %v503
        %v683 = vpop.permute.xlu0 %682
        %684 = vset.pattern.permute.xlu0 2
        %685 = vperm.xlu0 %684, %v504
        %v686 = vpop.permute.xlu0 %685
        %687 = vset.pattern.permute.xlu0 2
        %688 = vperm.xlu0 %687, %v505
        %v689 = vpop.permute.xlu0 %688
        %690 = vset.pattern.permute.xlu0 2
        %691 = vperm.xlu0 %690, %v506
        %v692 = vpop.permute.xlu0 %691
        %693 = vset.pattern.permute.xlu0 2
        %694 = vperm.xlu0 %693, %v507
        %v695 = vpop.permute.xlu0 %694
        %696 = vset.pattern.permute.xlu0 2
        %697 = vperm.xlu0 %696, %v508
        %v698 = vpop.permute.xlu0 %697
        %699 = vset.pattern.permute.xlu0 2
        %700 = vperm.xlu0 %699, %v509
        %v701 = vpop.permute.xlu0 %700
        %vm702 = vcmp.eq.s32.totalorder %v493, %v656
        %vm703 = vcmp.eq.s32.totalorder %v493, %v659
        %vm704 = vcmp.eq.s32.totalorder %v493, %v662
        %vm705 = vcmp.eq.s32.totalorder %v493, %v665
        %vm706 = vcmp.eq.s32.totalorder %v493, %v668
        %vm707 = vcmp.eq.s32.totalorder %v493, %v671
        %vm708 = vcmp.eq.s32.totalorder %v493, %v674
        %vm709 = vcmp.eq.s32.totalorder %v493, %v677
        %vm710 = vcmp.eq.s32.totalorder %v493, %v680
        %vm711 = vcmp.eq.s32.totalorder %v493, %v683
        %vm712 = vcmp.eq.s32.totalorder %v493, %v686
        %vm713 = vcmp.eq.s32.totalorder %v493, %v689
        %vm714 = vcmp.eq.s32.totalorder %v493, %v692
        %vm715 = vcmp.eq.s32.totalorder %v493, %v695
        %vm716 = vcmp.eq.s32.totalorder %v493, %v698
        %vm717 = vcmp.eq.s32.totalorder %v493, %v701
        %vm718 = vmor %vm638, %vm702
        %vm719 = vmor %vm639, %vm703
        %vm720 = vmor %vm640, %vm704
        %vm721 = vmor %vm641, %vm705
        %vm722 = vmor %vm642, %vm706
        %vm723 = vmor %vm643, %vm707
        %vm724 = vmor %vm644, %vm708
        %vm725 = vmor %vm645, %vm709
        %vm726 = vmor %vm646, %vm710
        %vm727 = vmor %vm647, %vm711
        %vm728 = vmor %vm648, %vm712
        %vm729 = vmor %vm649, %vm713
        %vm730 = vmor %vm650, %vm714
        %vm731 = vmor %vm651, %vm715
        %vm732 = vmor %vm652, %vm716
        %vm733 = vmor %vm653, %vm717
        %v734 = vld [vmem:[%s488] sm:$0xff]
        %v735 = vld [vmem:[%s488 + $0x8] sm:$0xff]
        %v736 = vld [vmem:[%s488 + $0x10] sm:$0xff]
        %v737 = vld [vmem:[%s488 + $0x18] sm:$0xff]
        %v738 = vld [vmem:[%s488 + $0x20] sm:$0xff]
        %v739 = vld [vmem:[%s488 + $0x28] sm:$0xff]
        %v740 = vld [vmem:[%s488 + $0x30] sm:$0xff]
        %v741 = vld [vmem:[%s488 + $0x38] sm:$0xff]
        %v742 = vld [vmem:[%s488 + $0x40] sm:$0xff]
        %v743 = vld [vmem:[%s488 + $0x48] sm:$0xff]
        %v744 = vld [vmem:[%s488 + $0x50] sm:$0xff]
        %v745 = vld [vmem:[%s488 + $0x58] sm:$0xff]
        %v746 = vld [vmem:[%s488 + $0x60] sm:$0xff]
        %v747 = vld [vmem:[%s488 + $0x68] sm:$0xff]
        %v748 = vld [vmem:[%s488 + $0x70] sm:$0xff]
        %v749 = vld [vmem:[%s488 + $0x78] sm:$0xff]
        %v750 = vsel %vm718, 1.0, %v734
        %v751 = vsel %vm719, 1.0, %v735
        %v752 = vsel %vm720, 1.0, %v736
        %v753 = vsel %vm721, 1.0, %v737
        %v754 = vsel %vm722, 1.0, %v738
        %v755 = vsel %vm723, 1.0, %v739
        %v756 = vsel %vm724, 1.0, %v740
        %v757 = vsel %vm725, 1.0, %v741
        %v758 = vsel %vm726, 1.0, %v742
        %v759 = vsel %vm727, 1.0, %v743
        %v760 = vsel %vm728, 1.0, %v744
        %v761 = vsel %vm729, 1.0, %v745
        %v762 = vsel %vm730, 1.0, %v746
        %v763 = vsel %vm731, 1.0, %v747
        %v764 = vsel %vm732, 1.0, %v748
        %v765 = vsel %vm733, 1.0, %v749
        %v766 = vpack.c.bf16 %v751, %v750
        %v767 = vpack.c.bf16 %v753, %v752
        %v768 = vpack.c.bf16 %v755, %v754
        %v769 = vpack.c.bf16 %v757, %v756
        %v770 = vpack.c.bf16 %v759, %v758
        %v771 = vpack.c.bf16 %v761, %v760
        %v772 = vpack.c.bf16 %v763, %v762
        %v773 = vpack.c.bf16 %v765, %v764
        %v774 = vld [vmem:[%s2] sm:$0xf]
        %v775 = vld [vmem:[%s2 + $0x4] sm:$0xf]
        %v776 = vld [vmem:[%s2 + $0x8] sm:$0x3]
        %v777 = vld [vmem:[%s3] sm:$0x1]
        %v779 = vlaneseq
        %v780 = vshrl.u32 %v779, 7
        %v781 = vsub.s32 0, %v780
        %v782 = vrot.slane %v777, %v781
        %v787 = vunpack.c.l.b16 %v774
        %v788 = vunpack.c.l.b16 %v775
        %v789 = vunpack.c.l.b16 %v776
        %v790 = vpack.c.b16 %v788, %v787
        %v791 = vpack.c.b16 %v789, %v789
        %vm793 = vcmask 162816
        %v795 = vsel %vm793, %v766, 0
        %v798 = vsel %vm793, %v767, 0
        %v801 = vsel %vm793, %v768, 0
        %v804 = vsel %vm793, %v769, 0
        %v807 = vsel %vm793, %v770, 0
        %v810 = vsel %vm793, %v771, 0
        %v813 = vsel %vm793, %v772, 0
        %v816 = vsel %vm793, %v773, 0
        %vm818 = vcmask 1041408
        %v820 = vsel %vm818, %v791, 0
        %822 = vmatprep.subr.bf16.mxu0 0
        %823 = vmatpush1.bf16.msra.mxu0 %v790
        %824 = vmatprep.subr.bf16.mxu0 0
        %825 = vmatpush1.bf16.msra.mxu0 %v820
        %826 = vmatprep.subr.bf16.mxu0 0
        %827 = vmatpush1.bf16.msra.mxu0 0
        %828 = vmatprep.subr.bf16.mxu0 0
        %829 = vmatpush1.bf16.msra.mxu0 0
        %830 = vmatprep.subr.bf16.mxu0 0
        %831 = vmatpush1.bf16.msra.mxu0 0
        %832 = vmatprep.subr.bf16.mxu0 0
        %833 = vmatpush1.bf16.msra.mxu0 0
        %834 = vmatprep.subr.bf16.mxu0 0
        %835 = vmatpush1.bf16.msra.mxu0 0
        %836 = vmatprep.subr.bf16.mxu0 0
        %837 = vmatpush1.bf16.msra.mxu0 0
        %838 = vmatprep.subr.bf16.mxu0 0
        %839 = vmatpush1.bf16.msra.mxu0 0
        %840 = vmatprep.subr.bf16.mxu0 0
        %841 = vmatpush1.bf16.msra.mxu0 0
        %842 = vmatprep.subr.bf16.mxu0 0
        %843 = vmatpush1.bf16.msra.mxu0 0
        %844 = vmatprep.subr.bf16.mxu0 0
        %845 = vmatpush1.bf16.msra.mxu0 0
        %846 = vmatprep.subr.bf16.mxu0 0
        %847 = vmatpush1.bf16.msra.mxu0 0
        %848 = vmatprep.subr.bf16.mxu0 0
        %849 = vmatpush1.bf16.msra.mxu0 0
        %850 = vmatprep.subr.bf16.mxu0 0
        %851 = vmatpush1.bf16.msra.mxu0 0
        %852 = vmatprep.subr.bf16.mxu0 0
        %853 = vmatpush1.bf16.msra.mxu0 0
        %854 = vmatprep.mubr.bf16.mxu0 0
        %855 = vmatmul.mubr.bf16.gmra.mrb[0].mxu0 %v795
        %v856 = vpop.f32.mrb[0].mxu0
        %v857 = vadd.f32 %v782, %v856
        %v858 = vpop.f32.mrb[0].mxu0
        %v859 = vpop.f32.mrb[0].mxu0
        %v860 = vadd.f32 %v782, %v859
        %v861 = vpop.f32.mrb[0].mxu0
        %862 = vmatprep.mubr.bf16.mxu0 0
        %863 = vmatmul.mubr.bf16.gmra.mrb[0].mxu0 %v798
        %v864 = vpop.f32.mrb[0].mxu0
        %v865 = vadd.f32 %v782, %v864
        %v866 = vpop.f32.mrb[0].mxu0
        %v867 = vpop.f32.mrb[0].mxu0
        %v868 = vadd.f32 %v782, %v867
        %v869 = vpop.f32.mrb[0].mxu0
        %870 = vmatprep.mubr.bf16.mxu0 0
        %871 = vmatmul.mubr.bf16.gmra.mrb[0].mxu0 %v801
        %v872 = vpop.f32.mrb[0].mxu0
        %v873 = vadd.f32 %v782, %v872
        %v874 = vpop.f32.mrb[0].mxu0
        %v875 = vpop.f32.mrb[0].mxu0
        %v876 = vadd.f32 %v782, %v875
        %v877 = vpop.f32.mrb[0].mxu0
        %878 = vmatprep.mubr.bf16.mxu0 0
        %879 = vmatmul.mubr.bf16.gmra.mrb[0].mxu0 %v804
        %v880 = vpop.f32.mrb[0].mxu0
        %v881 = vadd.f32 %v782, %v880
        %v882 = vpop.f32.mrb[0].mxu0
        %v883 = vpop.f32.mrb[0].mxu0
        %v884 = vadd.f32 %v782, %v883
        %v885 = vpop.f32.mrb[0].mxu0
        %886 = vmatprep.mubr.bf16.mxu0 0
        %887 = vmatmul.mubr.bf16.gmra.mrb[0].mxu0 %v807
        %v888 = vpop.f32.mrb[0].mxu0
        %v889 = vadd.f32 %v782, %v888
        %v890 = vpop.f32.mrb[0].mxu0
        %v891 = vpop.f32.mrb[0].mxu0
        %v892 = vadd.f32 %v782, %v891
        %v893 = vpop.f32.mrb[0].mxu0
        %894 = vmatprep.mubr.bf16.mxu0 0
        %895 = vmatmul.mubr.bf16.gmra.mrb[0].mxu0 %v810
        %v896 = vpop.f32.mrb[0].mxu0
        %v897 = vadd.f32 %v782, %v896
        %v898 = vpop.f32.mrb[0].mxu0
        %v899 = vpop.f32.mrb[0].mxu0
        %v900 = vadd.f32 %v782, %v899
        %v901 = vpop.f32.mrb[0].mxu0
        %902 = vmatprep.mubr.bf16.mxu0 0
        %903 = vmatmul.mubr.bf16.gmra.mrb[0].mxu0 %v813
        %v904 = vpop.f32.mrb[0].mxu0
        %v905 = vadd.f32 %v782, %v904
        %v906 = vpop.f32.mrb[0].mxu0
        %v907 = vpop.f32.mrb[0].mxu0
        %v908 = vadd.f32 %v782, %v907
        %v909 = vpop.f32.mrb[0].mxu0
        %910 = vmatprep.mubr.bf16.mxu0 0
        %911 = vmatmul.mubr.bf16.gmra.mrb[0].mxu0 %v816
        %v912 = vpop.f32.mrb[0].mxu0
        %v913 = vadd.f32 %v782, %v912
        %v914 = vpop.f32.mrb[0].mxu0
        %v915 = vpop.f32.mrb[0].mxu0
        %v916 = vadd.f32 %v782, %v915
        %v917 = vpop.f32.mrb[0].mxu0
        %918 = vdwg.mxu0
        %v919 = vmax.f32 %v857, 0.0
        %v920 = vmax.f32 %v860, 0.0
        %v921 = vmax.f32 %v865, 0.0
        %v922 = vmax.f32 %v868, 0.0
        %v923 = vmax.f32 %v873, 0.0
        %v924 = vmax.f32 %v876, 0.0
        %v925 = vmax.f32 %v881, 0.0
        %v926 = vmax.f32 %v884, 0.0
        %v927 = vmax.f32 %v889, 0.0
        %v928 = vmax.f32 %v892, 0.0
        %v929 = vmax.f32 %v897, 0.0
        %v930 = vmax.f32 %v900, 0.0
        %v931 = vmax.f32 %v905, 0.0
        %v932 = vmax.f32 %v908, 0.0
        %v933 = vmax.f32 %v913, 0.0
        %v934 = vmax.f32 %v916, 0.0
        %v935 = vpack.c.bf16 %v920, %v919
        %v936 = vpack.c.bf16 %v922, %v921
        %v937 = vpack.c.bf16 %v924, %v923
        %v938 = vpack.c.bf16 %v926, %v925
        %v939 = vpack.c.bf16 %v928, %v927
        %v940 = vpack.c.bf16 %v930, %v929
        %v941 = vpack.c.bf16 %v932, %v931
        %v942 = vpack.c.bf16 %v934, %v933
        %v943 = vld [vmem:[%s4] sm:$0xf]
        %v944 = vld [vmem:[%s4 + $0x4] sm:$0xf]
        %v945 = vld [vmem:[%s4 + $0x8] sm:$0xf]
        %v946 = vld [vmem:[%s4 + $0xc] sm:$0xf]
        %v947 = vld [vmem:[%s4 + $0x10] sm:$0xf]
        %v948 = vld [vmem:[%s4 + $0x14] sm:$0xf]
        %v949 = vld [vmem:[%s4 + $0x18] sm:$0xf]
        %v950 = vld [vmem:[%s4 + $0x1c] sm:$0xf]
        %v951 = vld [vmem:[%s4 + $0x20] sm:$0xf]
        %v952 = vld [vmem:[%s4 + $0x24] sm:$0xf]
        %v953 = vld [vmem:[%s4 + $0x28] sm:$0xf]
        %v954 = vld [vmem:[%s4 + $0x2c] sm:$0xf]
        %v955 = vld [vmem:[%s4 + $0x30] sm:$0xf]
        %v956 = vld [vmem:[%s4 + $0x34] sm:$0xf]
        %v957 = vld [vmem:[%s4 + $0x38] sm:$0xf]
        %v958 = vld [vmem:[%s4 + $0x3c] sm:$0xf]
        %v959 = vld [vmem:[%s5] sm:$0x1]
        %v961 = vlaneseq
        %v962 = vshrl.u32 %v961, 7
        %v963 = vsub.s32 0, %v962
        %v964 = vrot.slane %v959, %v963
        %v982 = vunpack.c.l.b16 %v943
        %v983 = vunpack.c.l.b16 %v944
        %v984 = vunpack.c.l.b16 %v945
        %v985 = vunpack.c.l.b16 %v946
        %v986 = vunpack.c.l.b16 %v947
        %v987 = vunpack.c.l.b16 %v948
        %v988 = vunpack.c.l.b16 %v949
        %v989 = vunpack.c.l.b16 %v950
        %v990 = vunpack.c.l.b16 %v951
        %v991 = vunpack.c.l.b16 %v952
        %v992 = vunpack.c.l.b16 %v953
        %v993 = vunpack.c.l.b16 %v954
        %v994 = vunpack.c.l.b16 %v955
        %v995 = vunpack.c.l.b16 %v956
        %v996 = vunpack.c.l.b16 %v957
        %v997 = vunpack.c.l.b16 %v958
        %v998 = vpack.c.b16 %v983, %v982
        %v999 = vpack.c.b16 %v985, %v984
        %v1000 = vpack.c.b16 %v987, %v986
        %v1001 = vpack.c.b16 %v989, %v988
        %v1002 = vpack.c.b16 %v991, %v990
        %v1003 = vpack.c.b16 %v993, %v992
        %v1004 = vpack.c.b16 %v995, %v994
        %v1005 = vpack.c.b16 %v997, %v996
        %1014 = vmatprep.subr.bf16.mxu0 0
        %1015 = vmatpush1.bf16.msra.mxu0 %v998
        %1016 = vmatprep.subr.bf16.mxu0 0
        %1017 = vmatpush1.bf16.msra.mxu0 %v999
        %1018 = vmatprep.subr.bf16.mxu0 0
        %1019 = vmatpush1.bf16.msra.mxu0 %v1000
        %1020 = vmatprep.subr.bf16.mxu0 0
        %1021 = vmatpush1.bf16.msra.mxu0 %v1001
        %1022 = vmatprep.subr.bf16.mxu0 0
        %1023 = vmatpush1.bf16.msra.mxu0 %v1002
        %1024 = vmatprep.subr.bf16.mxu0 0
        %1025 = vmatpush1.bf16.msra.mxu0 %v1003
        %1026 = vmatprep.subr.bf16.mxu0 0
        %1027 = vmatpush1.bf16.msra.mxu0 %v1004
        %1028 = vmatprep.subr.bf16.mxu0 0
        %1029 = vmatpush1.bf16.msra.mxu0 %v1005
        %1030 = vmatprep.subr.bf16.mxu0 0
        %1031 = vmatpush1.bf16.msra.mxu0 0
        %1032 = vmatprep.subr.bf16.mxu0 0
        %1033 = vmatpush1.bf16.msra.mxu0 0
        %1034 = vmatprep.subr.bf16.mxu0 0
        %1035 = vmatpush1.bf16.msra.mxu0 0
        %1036 = vmatprep.subr.bf16.mxu0 0
        %1037 = vmatpush1.bf16.msra.mxu0 0
        %1038 = vmatprep.subr.bf16.mxu0 0
        %1039 = vmatpush1.bf16.msra.mxu0 0
        %1040 = vmatprep.subr.bf16.mxu0 0
        %1041 = vmatpush1.bf16.msra.mxu0 0
        %1042 = vmatprep.subr.bf16.mxu0 0
        %1043 = vmatpush1.bf16.msra.mxu0 0
        %1044 = vmatprep.subr.bf16.mxu0 0
        %1045 = vmatpush1.bf16.msra.mxu0 0
        %1046 = vmatprep.mubr.bf16.mxu0 0
        %1047 = vmatmul.mubr.bf16.gmra.mrb[0].mxu0 %v935
        %v1048 = vpop.f32.mrb[0].mxu0
        %v1049 = vadd.f32 %v964, %v1048
        %v1050 = vpop.f32.mrb[0].mxu0
        %v1051 = vpop.f32.mrb[0].mxu0
        %v1052 = vadd.f32 %v964, %v1051
        %v1053 = vpop.f32.mrb[0].mxu0
        %1054 = vmatprep.mubr.bf16.mxu0 0
        %1055 = vmatmul.mubr.bf16.gmra.mrb[0].mxu0 %v936
        %v1056 = vpop.f32.mrb[0].mxu0
        %v1057 = vadd.f32 %v964, %v1056
        %v1058 = vpop.f32.mrb[0].mxu0
        %v1059 = vpop.f32.mrb[0].mxu0
        %v1060 = vadd.f32 %v964, %v1059
        %v1061 = vpop.f32.mrb[0].mxu0
        %1062 = vmatprep.mubr.bf16.mxu0 0
        %1063 = vmatmul.mubr.bf16.gmra.mrb[0].mxu0 %v937
        %v1064 = vpop.f32.mrb[0].mxu0
        %v1065 = vadd.f32 %v964, %v1064
        %v1066 = vpop.f32.mrb[0].mxu0
        %v1067 = vpop.f32.mrb[0].mxu0
        %v1068 = vadd.f32 %v964, %v1067
        %v1069 = vpop.f32.mrb[0].mxu0
        %1070 = vmatprep.mubr.bf16.mxu0 0
        %1071 = vmatmul.mubr.bf16.gmra.mrb[0].mxu0 %v938
        %v1072 = vpop.f32.mrb[0].mxu0
        %v1073 = vadd.f32 %v964, %v1072
        %v1074 = vpop.f32.mrb[0].mxu0
        %v1075 = vpop.f32.mrb[0].mxu0
        %v1076 = vadd.f32 %v964, %v1075
        %v1077 = vpop.f32.mrb[0].mxu0
        %1078 = vmatprep.mubr.bf16.mxu0 0
        %1079 = vmatmul.mubr.bf16.gmra.mrb[0].mxu0 %v939
        %v1080 = vpop.f32.mrb[0].mxu0
        %v1081 = vadd.f32 %v964, %v1080
        %v1082 = vpop.f32.mrb[0].mxu0
        %v1083 = vpop.f32.mrb[0].mxu0
        %v1084 = vadd.f32 %v964, %v1083
        %v1085 = vpop.f32.mrb[0].mxu0
        %1086 = vmatprep.mubr.bf16.mxu0 0
        %1087 = vmatmul.mubr.bf16.gmra.mrb[0].mxu0 %v940
        %v1088 = vpop.f32.mrb[0].mxu0
        %v1089 = vadd.f32 %v964, %v1088
        %v1090 = vpop.f32.mrb[0].mxu0
        %v1091 = vpop.f32.mrb[0].mxu0
        %v1092 = vadd.f32 %v964, %v1091
        %v1093 = vpop.f32.mrb[0].mxu0
        %1094 = vmatprep.mubr.bf16.mxu0 0
        %1095 = vmatmul.mubr.bf16.gmra.mrb[0].mxu0 %v941
        %v1096 = vpop.f32.mrb[0].mxu0
        %v1097 = vadd.f32 %v964, %v1096
        %v1098 = vpop.f32.mrb[0].mxu0
        %v1099 = vpop.f32.mrb[0].mxu0
        %v1100 = vadd.f32 %v964, %v1099
        %v1101 = vpop.f32.mrb[0].mxu0
        %1102 = vmatprep.mubr.bf16.mxu0 0
        %1103 = vmatmul.mubr.bf16.gmra.mrb[0].mxu0 %v942
        %v1104 = vpop.f32.mrb[0].mxu0
        %v1105 = vadd.f32 %v964, %v1104
        %v1106 = vpop.f32.mrb[0].mxu0
        %v1107 = vpop.f32.mrb[0].mxu0
        %v1108 = vadd.f32 %v964, %v1107
        %v1109 = vpop.f32.mrb[0].mxu0
        %1110 = vdwg.mxu0
        %v1111 = vmax.f32 %v1049, 0.0
        %v1112 = vmax.f32 %v1052, 0.0
        %v1113 = vmax.f32 %v1057, 0.0
        %v1114 = vmax.f32 %v1060, 0.0
        %v1115 = vmax.f32 %v1065, 0.0
        %v1116 = vmax.f32 %v1068, 0.0
        %v1117 = vmax.f32 %v1073, 0.0
        %v1118 = vmax.f32 %v1076, 0.0
        %v1119 = vmax.f32 %v1081, 0.0
        %v1120 = vmax.f32 %v1084, 0.0
        %v1121 = vmax.f32 %v1089, 0.0
        %v1122 = vmax.f32 %v1092, 0.0
        %v1123 = vmax.f32 %v1097, 0.0
        %v1124 = vmax.f32 %v1100, 0.0
        %v1125 = vmax.f32 %v1105, 0.0
        %v1126 = vmax.f32 %v1108, 0.0
        %v1127 = vpack.c.bf16 %v1112, %v1111
        %v1128 = vpack.c.bf16 %v1114, %v1113
        %v1129 = vpack.c.bf16 %v1116, %v1115
        %v1130 = vpack.c.bf16 %v1118, %v1117
        %v1131 = vpack.c.bf16 %v1120, %v1119
        %v1132 = vpack.c.bf16 %v1122, %v1121
        %v1133 = vpack.c.bf16 %v1124, %v1123
        %v1134 = vpack.c.bf16 %v1126, %v1125
        %v1135 = vld [vmem:[%s6] sm:$0xf]
        %v1136 = vld [vmem:[%s6 + $0x4] sm:$0xf]
        %v1137 = vld [vmem:[%s6 + $0x8] sm:$0xf]
        %v1138 = vld [vmem:[%s6 + $0xc] sm:$0xf]
        %v1139 = vld [vmem:[%s6 + $0x10] sm:$0xf]
        %v1140 = vld [vmem:[%s6 + $0x14] sm:$0xf]
        %v1141 = vld [vmem:[%s6 + $0x18] sm:$0xf]
        %v1142 = vld [vmem:[%s6 + $0x1c] sm:$0xf]
        %v1143 = vld [vmem:[%s6 + $0x20] sm:$0xf]
        %v1144 = vld [vmem:[%s6 + $0x24] sm:$0xf]
        %v1145 = vld [vmem:[%s6 + $0x28] sm:$0xf]
        %v1146 = vld [vmem:[%s6 + $0x2c] sm:$0xf]
        %v1147 = vld [vmem:[%s6 + $0x30] sm:$0xf]
        %v1148 = vld [vmem:[%s6 + $0x34] sm:$0xf]
        %v1149 = vld [vmem:[%s6 + $0x38] sm:$0xf]
        %v1150 = vld [vmem:[%s6 + $0x3c] sm:$0xf]
        %v1151 = vld [vmem:[%s7] sm:$0x1]
        %v1153 = vlaneseq
        %v1154 = vshrl.u32 %v1153, 7
        %v1155 = vsub.s32 0, %v1154
        %v1156 = vrot.slane %v1151, %v1155
        %v1174 = vunpack.c.l.b16 %v1135
        %v1175 = vunpack.c.l.b16 %v1136
        %v1176 = vunpack.c.l.b16 %v1137
        %v1177 = vunpack.c.l.b16 %v1138
        %v1178 = vunpack.c.l.b16 %v1139
        %v1179 = vunpack.c.l.b16 %v1140
        %v1180 = vunpack.c.l.b16 %v1141
        %v1181 = vunpack.c.l.b16 %v1142
        %v1182 = vunpack.c.l.b16 %v1143
        %v1183 = vunpack.c.l.b16 %v1144
        %v1184 = vunpack.c.l.b16 %v1145
        %v1185 = vunpack.c.l.b16 %v1146
        %v1186 = vunpack.c.l.b16 %v1147
        %v1187 = vunpack.c.l.b16 %v1148
        %v1188 = vunpack.c.l.b16 %v1149
        %v1189 = vunpack.c.l.b16 %v1150
        %v1190 = vpack.c.b16 %v1175, %v1174
        %v1191 = vpack.c.b16 %v1177, %v1176
        %v1192 = vpack.c.b16 %v1179, %v1178
        %v1193 = vpack.c.b16 %v1181, %v1180
        %v1194 = vpack.c.b16 %v1183, %v1182
        %v1195 = vpack.c.b16 %v1185, %v1184
        %v1196 = vpack.c.b16 %v1187, %v1186
        %v1197 = vpack.c.b16 %v1189, %v1188
        %1206 = vmatprep.subr.bf16.mxu0 0
        %1207 = vmatpush1.bf16.msra.mxu0 %v1190
        %1208 = vmatprep.subr.bf16.mxu0 0
        %1209 = vmatpush1.bf16.msra.mxu0 %v1191
        %1210 = vmatprep.subr.bf16.mxu0 0
        %1211 = vmatpush1.bf16.msra.mxu0 %v1192
        %1212 = vmatprep.subr.bf16.mxu0 0
        %1213 = vmatpush1.bf16.msra.mxu0 %v1193
        %1214 = vmatprep.subr.bf16.mxu0 0
        %1215 = vmatpush1.bf16.msra.mxu0 %v1194
        %1216 = vmatprep.subr.bf16.mxu0 0
        %1217 = vmatpush1.bf16.msra.mxu0 %v1195
        %1218 = vmatprep.subr.bf16.mxu0 0
        %1219 = vmatpush1.bf16.msra.mxu0 %v1196
        %1220 = vmatprep.subr.bf16.mxu0 0
        %1221 = vmatpush1.bf16.msra.mxu0 %v1197
        %1222 = vmatprep.subr.bf16.mxu0 0
        %1223 = vmatpush1.bf16.msra.mxu0 0
        %1224 = vmatprep.subr.bf16.mxu0 0
        %1225 = vmatpush1.bf16.msra.mxu0 0
        %1226 = vmatprep.subr.bf16.mxu0 0
        %1227 = vmatpush1.bf16.msra.mxu0 0
        %1228 = vmatprep.subr.bf16.mxu0 0
        %1229 = vmatpush1.bf16.msra.mxu0 0
        %1230 = vmatprep.subr.bf16.mxu0 0
        %1231 = vmatpush1.bf16.msra.mxu0 0
        %1232 = vmatprep.subr.bf16.mxu0 0
        %1233 = vmatpush1.bf16.msra.mxu0 0
        %1234 = vmatprep.subr.bf16.mxu0 0
        %1235 = vmatpush1.bf16.msra.mxu0 0
        %1236 = vmatprep.subr.bf16.mxu0 0
        %1237 = vmatpush1.bf16.msra.mxu0 0
        %1238 = vmatprep.mubr.bf16.mxu0 0
        %1239 = vmatmul.mubr.bf16.gmra.mrb[0].mxu0 %v1127
        %v1240 = vpop.f32.mrb[0].mxu0
        %v1241 = vadd.f32 %v1156, %v1240
        %v1242 = vpop.f32.mrb[0].mxu0
        %v1243 = vpop.f32.mrb[0].mxu0
        %v1244 = vadd.f32 %v1156, %v1243
        %v1245 = vpop.f32.mrb[0].mxu0
        %1246 = vmatprep.mubr.bf16.mxu0 0
        %1247 = vmatmul.mubr.bf16.gmra.mrb[0].mxu0 %v1128
        %v1248 = vpop.f32.mrb[0].mxu0
        %v1249 = vadd.f32 %v1156, %v1248
        %v1250 = vpop.f32.mrb[0].mxu0
        %v1251 = vpop.f32.mrb[0].mxu0
        %v1252 = vadd.f32 %v1156, %v1251
        %v1253 = vpop.f32.mrb[0].mxu0
        %1254 = vmatprep.mubr.bf16.mxu0 0
        %1255 = vmatmul.mubr.bf16.gmra.mrb[0].mxu0 %v1129
        %v1256 = vpop.f32.mrb[0].mxu0
        %v1257 = vadd.f32 %v1156, %v1256
        %v1258 = vpop.f32.mrb[0].mxu0
        %v1259 = vpop.f32.mrb[0].mxu0
        %v1260 = vadd.f32 %v1156, %v1259
        %v1261 = vpop.f32.mrb[0].mxu0
        %1262 = vmatprep.mubr.bf16.mxu0 0
        %1263 = vmatmul.mubr.bf16.gmra.mrb[0].mxu0 %v1130
        %v1264 = vpop.f32.mrb[0].mxu0
        %v1265 = vadd.f32 %v1156, %v1264
        %v1266 = vpop.f32.mrb[0].mxu0
        %v1267 = vpop.f32.mrb[0].mxu0
        %v1268 = vadd.f32 %v1156, %v1267
        %v1269 = vpop.f32.mrb[0].mxu0
        %1270 = vmatprep.mubr.bf16.mxu0 0
        %1271 = vmatmul.mubr.bf16.gmra.mrb[0].mxu0 %v1131
        %v1272 = vpop.f32.mrb[0].mxu0
        %v1273 = vadd.f32 %v1156, %v1272
        %v1274 = vpop.f32.mrb[0].mxu0
        %v1275 = vpop.f32.mrb[0].mxu0
        %v1276 = vadd.f32 %v1156, %v1275
        %v1277 = vpop.f32.mrb[0].mxu0
        %1278 = vmatprep.mubr.bf16.mxu0 0
        %1279 = vmatmul.mubr.bf16.gmra.mrb[0].mxu0 %v1132
        %v1280 = vpop.f32.mrb[0].mxu0
        %v1281 = vadd.f32 %v1156, %v1280
        %v1282 = vpop.f32.mrb[0].mxu0
        %v1283 = vpop.f32.mrb[0].mxu0
        %v1284 = vadd.f32 %v1156, %v1283
        %v1285 = vpop.f32.mrb[0].mxu0
        %1286 = vmatprep.mubr.bf16.mxu0 0
        %1287 = vmatmul.mubr.bf16.gmra.mrb[0].mxu0 %v1133
        %v1288 = vpop.f32.mrb[0].mxu0
        %v1289 = vadd.f32 %v1156, %v1288
        %v1290 = vpop.f32.mrb[0].mxu0
        %v1291 = vpop.f32.mrb[0].mxu0
        %v1292 = vadd.f32 %v1156, %v1291
        %v1293 = vpop.f32.mrb[0].mxu0
        %1294 = vmatprep.mubr.bf16.mxu0 0
        %1295 = vmatmul.mubr.bf16.gmra.mrb[0].mxu0 %v1134
        %v1296 = vpop.f32.mrb[0].mxu0
        %v1297 = vadd.f32 %v1156, %v1296
        %v1298 = vpop.f32.mrb[0].mxu0
        %v1299 = vpop.f32.mrb[0].mxu0
        %v1300 = vadd.f32 %v1156, %v1299
        %v1301 = vpop.f32.mrb[0].mxu0
        %1302 = vdwg.mxu0
        %v1303 = vmax.f32 %v1241, 0.0
        %v1304 = vmax.f32 %v1244, 0.0
        %v1305 = vmax.f32 %v1249, 0.0
        %v1306 = vmax.f32 %v1252, 0.0
        %v1307 = vmax.f32 %v1257, 0.0
        %v1308 = vmax.f32 %v1260, 0.0
        %v1309 = vmax.f32 %v1265, 0.0
        %v1310 = vmax.f32 %v1268, 0.0
        %v1311 = vmax.f32 %v1273, 0.0
        %v1312 = vmax.f32 %v1276, 0.0
        %v1313 = vmax.f32 %v1281, 0.0
        %v1314 = vmax.f32 %v1284, 0.0
        %v1315 = vmax.f32 %v1289, 0.0
        %v1316 = vmax.f32 %v1292, 0.0
        %v1317 = vmax.f32 %v1297, 0.0
        %v1318 = vmax.f32 %v1300, 0.0
        %v1319 = vpack.c.bf16 %v1304, %v1303
        %v1320 = vpack.c.bf16 %v1306, %v1305
        %v1321 = vpack.c.bf16 %v1308, %v1307
        %v1322 = vpack.c.bf16 %v1310, %v1309
        %v1323 = vpack.c.bf16 %v1312, %v1311
        %v1324 = vpack.c.bf16 %v1314, %v1313
        %v1325 = vpack.c.bf16 %v1316, %v1315
        %v1326 = vpack.c.bf16 %v1318, %v1317
        %v1327 = vld [vmem:[%s8] sm:$0xf]
        %v1328 = vld [vmem:[%s8 + $0x4] sm:$0xf]
        %v1329 = vld [vmem:[%s8 + $0x8] sm:$0xf]
        %v1330 = vld [vmem:[%s8 + $0xc] sm:$0xf]
        %v1331 = vld [vmem:[%s8 + $0x10] sm:$0xf]
        %v1332 = vld [vmem:[%s8 + $0x14] sm:$0xf]
        %v1333 = vld [vmem:[%s8 + $0x18] sm:$0xf]
        %v1334 = vld [vmem:[%s8 + $0x1c] sm:$0xf]
        %v1335 = vld [vmem:[%s8 + $0x20] sm:$0xf]
        %v1336 = vld [vmem:[%s8 + $0x24] sm:$0xf]
        %v1337 = vld [vmem:[%s8 + $0x28] sm:$0xf]
        %v1338 = vld [vmem:[%s8 + $0x2c] sm:$0xf]
        %v1339 = vld [vmem:[%s8 + $0x30] sm:$0xf]
        %v1340 = vld [vmem:[%s8 + $0x34] sm:$0xf]
        %v1341 = vld [vmem:[%s8 + $0x38] sm:$0xf]
        %v1342 = vld [vmem:[%s8 + $0x3c] sm:$0xf]
        %v1343 = vld [vmem:[%s9] sm:$0x1]
        %v1345 = vlaneseq
        %v1346 = vshrl.u32 %v1345, 7
        %v1347 = vsub.s32 0, %v1346
        %v1348 = vrot.slane %v1343, %v1347
        %v1366 = vunpack.c.l.b16 %v1327
        %v1367 = vunpack.c.l.b16 %v1328
        %v1368 = vunpack.c.l.b16 %v1329
        %v1369 = vunpack.c.l.b16 %v1330
        %v1370 = vunpack.c.l.b16 %v1331
        %v1371 = vunpack.c.l.b16 %v1332
        %v1372 = vunpack.c.l.b16 %v1333
        %v1373 = vunpack.c.l.b16 %v1334
        %v1374 = vunpack.c.l.b16 %v1335
        %v1375 = vunpack.c.l.b16 %v1336
        %v1376 = vunpack.c.l.b16 %v1337
        %v1377 = vunpack.c.l.b16 %v1338
        %v1378 = vunpack.c.l.b16 %v1339
        %v1379 = vunpack.c.l.b16 %v1340
        %v1380 = vunpack.c.l.b16 %v1341
        %v1381 = vunpack.c.l.b16 %v1342
        %v1382 = vpack.c.b16 %v1367, %v1366
        %v1383 = vpack.c.b16 %v1369, %v1368
        %v1384 = vpack.c.b16 %v1371, %v1370
        %v1385 = vpack.c.b16 %v1373, %v1372
        %v1386 = vpack.c.b16 %v1375, %v1374
        %v1387 = vpack.c.b16 %v1377, %v1376
        %v1388 = vpack.c.b16 %v1379, %v1378
        %v1389 = vpack.c.b16 %v1381, %v1380
        %1398 = vmatprep.subr.bf16.mxu0 0
        %1399 = vmatpush1.bf16.msra.mxu0 %v1382
        %1400 = vmatprep.subr.bf16.mxu0 0
        %1401 = vmatpush1.bf16.msra.mxu0 %v1383
        %1402 = vmatprep.subr.bf16.mxu0 0
        %1403 = vmatpush1.bf16.msra.mxu0 %v1384
        %1404 = vmatprep.subr.bf16.mxu0 0
        %1405 = vmatpush1.bf16.msra.mxu0 %v1385
        %1406 = vmatprep.subr.bf16.mxu0 0
        %1407 = vmatpush1.bf16.msra.mxu0 %v1386
        %1408 = vmatprep.subr.bf16.mxu0 0
        %1409 = vmatpush1.bf16.msra.mxu0 %v1387
        %1410 = vmatprep.subr.bf16.mxu0 0
        %1411 = vmatpush1.bf16.msra.mxu0 %v1388
        %1412 = vmatprep.subr.bf16.mxu0 0
        %1413 = vmatpush1.bf16.msra.mxu0 %v1389
        %1414 = vmatprep.subr.bf16.mxu0 0
        %1415 = vmatpush1.bf16.msra.mxu0 0
        %1416 = vmatprep.subr.bf16.mxu0 0
        %1417 = vmatpush1.bf16.msra.mxu0 0
        %1418 = vmatprep.subr.bf16.mxu0 0
        %1419 = vmatpush1.bf16.msra.mxu0 0
        %1420 = vmatprep.subr.bf16.mxu0 0
        %1421 = vmatpush1.bf16.msra.mxu0 0
        %1422 = vmatprep.subr.bf16.mxu0 0
        %1423 = vmatpush1.bf16.msra.mxu0 0
        %1424 = vmatprep.subr.bf16.mxu0 0
        %1425 = vmatpush1.bf16.msra.mxu0 0
        %1426 = vmatprep.subr.bf16.mxu0 0
        %1427 = vmatpush1.bf16.msra.mxu0 0
        %1428 = vmatprep.subr.bf16.mxu0 0
        %1429 = vmatpush1.bf16.msra.mxu0 0
        %1430 = vmatprep.mubr.bf16.mxu0 0
        %1431 = vmatmul.mubr.bf16.gmra.mrb[0].mxu0 %v1319
        %v1432 = vpop.f32.mrb[0].mxu0
        %v1433 = vadd.f32 %v1348, %v1432
        %v1434 = vpop.f32.mrb[0].mxu0
        %v1435 = vpop.f32.mrb[0].mxu0
        %v1436 = vadd.f32 %v1348, %v1435
        %v1437 = vpop.f32.mrb[0].mxu0
        %1438 = vmatprep.mubr.bf16.mxu0 0
        %1439 = vmatmul.mubr.bf16.gmra.mrb[0].mxu0 %v1320
        %v1440 = vpop.f32.mrb[0].mxu0
        %v1441 = vadd.f32 %v1348, %v1440
        %v1442 = vpop.f32.mrb[0].mxu0
        %v1443 = vpop.f32.mrb[0].mxu0
        %v1444 = vadd.f32 %v1348, %v1443
        %v1445 = vpop.f32.mrb[0].mxu0
        %1446 = vmatprep.mubr.bf16.mxu0 0
        %1447 = vmatmul.mubr.bf16.gmra.mrb[0].mxu0 %v1321
        %v1448 = vpop.f32.mrb[0].mxu0
        %v1449 = vadd.f32 %v1348, %v1448
        %v1450 = vpop.f32.mrb[0].mxu0
        %v1451 = vpop.f32.mrb[0].mxu0
        %v1452 = vadd.f32 %v1348, %v1451
        %v1453 = vpop.f32.mrb[0].mxu0
        %1454 = vmatprep.mubr.bf16.mxu0 0
        %1455 = vmatmul.mubr.bf16.gmra.mrb[0].mxu0 %v1322
        %v1456 = vpop.f32.mrb[0].mxu0
        %v1457 = vadd.f32 %v1348, %v1456
        %v1458 = vpop.f32.mrb[0].mxu0
        %v1459 = vpop.f32.mrb[0].mxu0
        %v1460 = vadd.f32 %v1348, %v1459
        %v1461 = vpop.f32.mrb[0].mxu0
        %1462 = vmatprep.mubr.bf16.mxu0 0
        %1463 = vmatmul.mubr.bf16.gmra.mrb[0].mxu0 %v1323
        %v1464 = vpop.f32.mrb[0].mxu0
        %v1465 = vadd.f32 %v1348, %v1464
        %v1466 = vpop.f32.mrb[0].mxu0
        %v1467 = vpop.f32.mrb[0].mxu0
        %v1468 = vadd.f32 %v1348, %v1467
        %v1469 = vpop.f32.mrb[0].mxu0
        %1470 = vmatprep.mubr.bf16.mxu0 0
        %1471 = vmatmul.mubr.bf16.gmra.mrb[0].mxu0 %v1324
        %v1472 = vpop.f32.mrb[0].mxu0
        %v1473 = vadd.f32 %v1348, %v1472
        %v1474 = vpop.f32.mrb[0].mxu0
        %v1475 = vpop.f32.mrb[0].mxu0
        %v1476 = vadd.f32 %v1348, %v1475
        %v1477 = vpop.f32.mrb[0].mxu0
        %1478 = vmatprep.mubr.bf16.mxu0 0
        %1479 = vmatmul.mubr.bf16.gmra.mrb[0].mxu0 %v1325
        %v1480 = vpop.f32.mrb[0].mxu0
        %v1481 = vadd.f32 %v1348, %v1480
        %v1482 = vpop.f32.mrb[0].mxu0
        %v1483 = vpop.f32.mrb[0].mxu0
        %v1484 = vadd.f32 %v1348, %v1483
        %v1485 = vpop.f32.mrb[0].mxu0
        %1486 = vmatprep.mubr.bf16.mxu0 0
        %1487 = vmatmul.mubr.bf16.gmra.mrb[0].mxu0 %v1326
        %v1488 = vpop.f32.mrb[0].mxu0
        %v1489 = vadd.f32 %v1348, %v1488
        %v1490 = vpop.f32.mrb[0].mxu0
        %v1491 = vpop.f32.mrb[0].mxu0
        %v1492 = vadd.f32 %v1348, %v1491
        %v1493 = vpop.f32.mrb[0].mxu0
        %1494 = vdwg.mxu0
        %v1495 = vmax.f32 %v1433, 0.0
        %v1496 = vmax.f32 %v1436, 0.0
        %v1497 = vmax.f32 %v1441, 0.0
        %v1498 = vmax.f32 %v1444, 0.0
        %v1499 = vmax.f32 %v1449, 0.0
        %v1500 = vmax.f32 %v1452, 0.0
        %v1501 = vmax.f32 %v1457, 0.0
        %v1502 = vmax.f32 %v1460, 0.0
        %v1503 = vmax.f32 %v1465, 0.0
        %v1504 = vmax.f32 %v1468, 0.0
        %v1505 = vmax.f32 %v1473, 0.0
        %v1506 = vmax.f32 %v1476, 0.0
        %v1507 = vmax.f32 %v1481, 0.0
        %v1508 = vmax.f32 %v1484, 0.0
        %v1509 = vmax.f32 %v1489, 0.0
        %v1510 = vmax.f32 %v1492, 0.0
        %v1511 = vpack.c.bf16 %v1496, %v1495
        %v1512 = vpack.c.bf16 %v1498, %v1497
        %v1513 = vpack.c.bf16 %v1500, %v1499
        %v1514 = vpack.c.bf16 %v1502, %v1501
        %v1515 = vpack.c.bf16 %v1504, %v1503
        %v1516 = vpack.c.bf16 %v1506, %v1505
        %v1517 = vpack.c.bf16 %v1508, %v1507
        %v1518 = vpack.c.bf16 %v1510, %v1509
        %v1519 = vld [vmem:[%s10] sm:$0xf]
        %v1520 = vld [vmem:[%s10 + $0x4] sm:$0xf]
        %v1521 = vld [vmem:[%s10 + $0x8] sm:$0xf]
        %v1522 = vld [vmem:[%s10 + $0xc] sm:$0xf]
        %v1523 = vld [vmem:[%s10 + $0x10] sm:$0xf]
        %v1524 = vld [vmem:[%s10 + $0x14] sm:$0xf]
        %v1525 = vld [vmem:[%s10 + $0x18] sm:$0xf]
        %v1526 = vld [vmem:[%s10 + $0x1c] sm:$0xf]
        %v1527 = vld [vmem:[%s10 + $0x20] sm:$0xf]
        %v1528 = vld [vmem:[%s10 + $0x24] sm:$0xf]
        %v1529 = vld [vmem:[%s10 + $0x28] sm:$0xf]
        %v1530 = vld [vmem:[%s10 + $0x2c] sm:$0xf]
        %v1531 = vld [vmem:[%s10 + $0x30] sm:$0xf]
        %v1532 = vld [vmem:[%s10 + $0x34] sm:$0xf]
        %v1533 = vld [vmem:[%s10 + $0x38] sm:$0xf]
        %v1534 = vld [vmem:[%s10 + $0x3c] sm:$0xf]
        %v1535 = vld [vmem:[%s11] sm:$0x1]
        %v1537 = vlaneseq
        %v1538 = vshrl.u32 %v1537, 7
        %v1539 = vsub.s32 0, %v1538
        %v1540 = vrot.slane %v1535, %v1539
        %v1558 = vunpack.c.l.b16 %v1519
        %v1559 = vunpack.c.l.b16 %v1520
        %v1560 = vunpack.c.l.b16 %v1521
        %v1561 = vunpack.c.l.b16 %v1522
        %v1562 = vunpack.c.l.b16 %v1523
        %v1563 = vunpack.c.l.b16 %v1524
        %v1564 = vunpack.c.l.b16 %v1525
        %v1565 = vunpack.c.l.b16 %v1526
        %v1566 = vunpack.c.l.b16 %v1527
        %v1567 = vunpack.c.l.b16 %v1528
        %v1568 = vunpack.c.l.b16 %v1529
        %v1569 = vunpack.c.l.b16 %v1530
        %v1570 = vunpack.c.l.b16 %v1531
        %v1571 = vunpack.c.l.b16 %v1532
        %v1572 = vunpack.c.l.b16 %v1533
        %v1573 = vunpack.c.l.b16 %v1534
        %v1574 = vpack.c.b16 %v1559, %v1558
        %v1575 = vpack.c.b16 %v1561, %v1560
        %v1576 = vpack.c.b16 %v1563, %v1562
        %v1577 = vpack.c.b16 %v1565, %v1564
        %v1578 = vpack.c.b16 %v1567, %v1566
        %v1579 = vpack.c.b16 %v1569, %v1568
        %v1580 = vpack.c.b16 %v1571, %v1570
        %v1581 = vpack.c.b16 %v1573, %v1572
        %1590 = vmatprep.subr.bf16.mxu0 0
        %1591 = vmatpush1.bf16.msra.mxu0 %v1574
        %1592 = vmatprep.subr.bf16.mxu0 0
        %1593 = vmatpush1.bf16.msra.mxu0 %v1575
        %1594 = vmatprep.subr.bf16.mxu0 0
        %1595 = vmatpush1.bf16.msra.mxu0 %v1576
        %1596 = vmatprep.subr.bf16.mxu0 0
        %1597 = vmatpush1.bf16.msra.mxu0 %v1577
        %1598 = vmatprep.subr.bf16.mxu0 0
        %1599 = vmatpush1.bf16.msra.mxu0 %v1578
        %1600 = vmatprep.subr.bf16.mxu0 0
        %1601 = vmatpush1.bf16.msra.mxu0 %v1579
        %1602 = vmatprep.subr.bf16.mxu0 0
        %1603 = vmatpush1.bf16.msra.mxu0 %v1580
        %1604 = vmatprep.subr.bf16.mxu0 0
        %1605 = vmatpush1.bf16.msra.mxu0 %v1581
        %1606 = vmatprep.subr.bf16.mxu0 0
        %1607 = vmatpush1.bf16.msra.mxu0 0
        %1608 = vmatprep.subr.bf16.mxu0 0
        %1609 = vmatpush1.bf16.msra.mxu0 0
        %1610 = vmatprep.subr.bf16.mxu0 0
        %1611 = vmatpush1.bf16.msra.mxu0 0
        %1612 = vmatprep.subr.bf16.mxu0 0
        %1613 = vmatpush1.bf16.msra.mxu0 0
        %1614 = vmatprep.subr.bf16.mxu0 0
        %1615 = vmatpush1.bf16.msra.mxu0 0
        %1616 = vmatprep.subr.bf16.mxu0 0
        %1617 = vmatpush1.bf16.msra.mxu0 0
        %1618 = vmatprep.subr.bf16.mxu0 0
        %1619 = vmatpush1.bf16.msra.mxu0 0
        %1620 = vmatprep.subr.bf16.mxu0 0
        %1621 = vmatpush1.bf16.msra.mxu0 0
        %1622 = vmatprep.mubr.bf16.mxu0 0
        %1623 = vmatmul.mubr.bf16.gmra.mrb[0].mxu0 %v1511
        %v1624 = vpop.f32.mrb[0].mxu0
        %v1625 = vadd.f32 %v1540, %v1624
        %v1626 = vpop.f32.mrb[0].mxu0
        %v1627 = vpop.f32.mrb[0].mxu0
        %v1628 = vadd.f32 %v1540, %v1627
        %v1629 = vpop.f32.mrb[0].mxu0
        %1630 = vmatprep.mubr.bf16.mxu0 0
        %1631 = vmatmul.mubr.bf16.gmra.mrb[0].mxu0 %v1512
        %v1632 = vpop.f32.mrb[0].mxu0
        %v1633 = vadd.f32 %v1540, %v1632
        %v1634 = vpop.f32.mrb[0].mxu0
        %v1635 = vpop.f32.mrb[0].mxu0
        %v1636 = vadd.f32 %v1540, %v1635
        %v1637 = vpop.f32.mrb[0].mxu0
        %1638 = vmatprep.mubr.bf16.mxu0 0
        %1639 = vmatmul.mubr.bf16.gmra.mrb[0].mxu0 %v1513
        %v1640 = vpop.f32.mrb[0].mxu0
        %v1641 = vadd.f32 %v1540, %v1640
        %v1642 = vpop.f32.mrb[0].mxu0
        %v1643 = vpop.f32.mrb[0].mxu0
        %v1644 = vadd.f32 %v1540, %v1643
        %v1645 = vpop.f32.mrb[0].mxu0
        %1646 = vmatprep.mubr.bf16.mxu0 0
        %1647 = vmatmul.mubr.bf16.gmra.mrb[0].mxu0 %v1514
        %v1648 = vpop.f32.mrb[0].mxu0
        %v1649 = vadd.f32 %v1540, %v1648
        %v1650 = vpop.f32.mrb[0].mxu0
        %v1651 = vpop.f32.mrb[0].mxu0
        %v1652 = vadd.f32 %v1540, %v1651
        %v1653 = vpop.f32.mrb[0].mxu0
        %1654 = vmatprep.mubr.bf16.mxu0 0
        %1655 = vmatmul.mubr.bf16.gmra.mrb[0].mxu0 %v1515
        %v1656 = vpop.f32.mrb[0].mxu0
        %v1657 = vadd.f32 %v1540, %v1656
        %v1658 = vpop.f32.mrb[0].mxu0
        %v1659 = vpop.f32.mrb[0].mxu0
        %v1660 = vadd.f32 %v1540, %v1659
        %v1661 = vpop.f32.mrb[0].mxu0
        %1662 = vmatprep.mubr.bf16.mxu0 0
        %1663 = vmatmul.mubr.bf16.gmra.mrb[0].mxu0 %v1516
        %v1664 = vpop.f32.mrb[0].mxu0
        %v1665 = vadd.f32 %v1540, %v1664
        %v1666 = vpop.f32.mrb[0].mxu0
        %v1667 = vpop.f32.mrb[0].mxu0
        %v1668 = vadd.f32 %v1540, %v1667
        %v1669 = vpop.f32.mrb[0].mxu0
        %1670 = vmatprep.mubr.bf16.mxu0 0
        %1671 = vmatmul.mubr.bf16.gmra.mrb[0].mxu0 %v1517
        %v1672 = vpop.f32.mrb[0].mxu0
        %v1673 = vadd.f32 %v1540, %v1672
        %v1674 = vpop.f32.mrb[0].mxu0
        %v1675 = vpop.f32.mrb[0].mxu0
        %v1676 = vadd.f32 %v1540, %v1675
        %v1677 = vpop.f32.mrb[0].mxu0
        %1678 = vmatprep.mubr.bf16.mxu0 0
        %1679 = vmatmul.mubr.bf16.gmra.mrb[0].mxu0 %v1518
        %v1680 = vpop.f32.mrb[0].mxu0
        %v1681 = vadd.f32 %v1540, %v1680
        %v1682 = vpop.f32.mrb[0].mxu0
        %v1683 = vpop.f32.mrb[0].mxu0
        %v1684 = vadd.f32 %v1540, %v1683
        %v1685 = vpop.f32.mrb[0].mxu0
        %1686 = vdwg.mxu0
        %v1687 = vld [vmem:[%s12] sm:$0x1]
        %v1689 = vlaneseq
        %v1690 = vshrl.u32 %v1689, 7
        %v1691 = vsub.s32 0, %v1690
        %v1692 = vrot.slane %v1687, %v1691
        %v1694 = vmax.f32 %v1625, %v1692
        %v1695 = vmax.f32 %v1628, %v1692
        %v1696 = vmax.f32 %v1633, %v1692
        %v1697 = vmax.f32 %v1636, %v1692
        %v1698 = vmax.f32 %v1641, %v1692
        %v1699 = vmax.f32 %v1644, %v1692
        %v1700 = vmax.f32 %v1649, %v1692
        %v1701 = vmax.f32 %v1652, %v1692
        %v1702 = vmax.f32 %v1657, %v1692
        %v1703 = vmax.f32 %v1660, %v1692
        %v1704 = vmax.f32 %v1665, %v1692
        %v1705 = vmax.f32 %v1668, %v1692
        %v1706 = vmax.f32 %v1673, %v1692
        %v1707 = vmax.f32 %v1676, %v1692
        %v1708 = vmax.f32 %v1681, %v1692
        %v1709 = vmax.f32 %v1684, %v1692
        %v1710 = vld [vmem:[%s13] sm:$0x1]
        %v1712 = vlaneseq
        %v1713 = vshrl.u32 %v1712, 7
        %v1714 = vsub.s32 0, %v1713
        %v1715 = vrot.slane %v1710, %v1714
        %v1717 = vmin.f32 %v1694, %v1715
        %v1718 = vmin.f32 %v1695, %v1715
        %v1719 = vmin.f32 %v1696, %v1715
        %v1720 = vmin.f32 %v1697, %v1715
        %v1721 = vmin.f32 %v1698, %v1715
        %v1722 = vmin.f32 %v1699, %v1715
        %v1723 = vmin.f32 %v1700, %v1715
        %v1724 = vmin.f32 %v1701, %v1715
        %v1725 = vmin.f32 %v1702, %v1715
        %v1726 = vmin.f32 %v1703, %v1715
        %v1727 = vmin.f32 %v1704, %v1715
        %v1728 = vmin.f32 %v1705, %v1715
        %v1729 = vmin.f32 %v1706, %v1715
        %v1730 = vmin.f32 %v1707, %v1715
        %v1731 = vmin.f32 %v1708, %v1715
        %v1732 = vmin.f32 %v1709, %v1715
        %1733 = vst [vmem:[%s477] sm:$0xff] %v1717
        %1734 = vst [vmem:[%s477 + $0x8] sm:$0xff] %v1718
        %1735 = vst [vmem:[%s477 + $0x10] sm:$0xff] %v1719
        %1736 = vst [vmem:[%s477 + $0x18] sm:$0xff] %v1720
        %1737 = vst [vmem:[%s477 + $0x20] sm:$0xff] %v1721
        %1738 = vst [vmem:[%s477 + $0x28] sm:$0xff] %v1722
        %1739 = vst [vmem:[%s477 + $0x30] sm:$0xff] %v1723
        %1740 = vst [vmem:[%s477 + $0x38] sm:$0xff] %v1724
        %1741 = vst [vmem:[%s477 + $0x40] sm:$0xff] %v1725
        %1742 = vst [vmem:[%s477 + $0x48] sm:$0xff] %v1726
        %1743 = vst [vmem:[%s477 + $0x50] sm:$0xff] %v1727
        %1744 = vst [vmem:[%s477 + $0x58] sm:$0xff] %v1728
        %1745 = vst [vmem:[%s477 + $0x60] sm:$0xff] %v1729
        %1746 = vst [vmem:[%s477 + $0x68] sm:$0xff] %v1730
        %1747 = vst [vmem:[%s477 + $0x70] sm:$0xff] %v1731
        %1748 = vst [vmem:[%s477 + $0x78] sm:$0xff] %v1732
        %s1749 = sand.u32 %s340, 1
        %s1750 = scalar_lea.sflag [#allocation3], %s1749
        %s1751 = sand.u32 %s340, 1
        %s1752 = smul.addr %s1751, 128
        %s1753 = scalar_lea.vmem [#allocation2], %s1752
        // Predicated region
        $region77: #{tpu_custom_call.1} parent=75 // pred_check
          %p1754 = pneg %p350
        $region78: #{tpu_custom_call.1} parent=75 // pred_check_branch
          %1756 = sbr.rel (%p1754) target = $region80
        $region79: #{tpu_custom_call.1} parent=75 // pred_region
          %s1757 = smul.u32 16, %s28
          %s1759 = ssub.s32 2048, 2048
          %1760 = vsyncadd %s1750, %s1759
          %s1761 = smul.addr %s1757, 128
          %s1762 = scalar_lea.hbm %s14, %s1761
          %s1763 = sshll.u32 %s1753, 4
          %s1764 = int_to_ptr.vmem [resolvable:$true] %s1763
          %1769 = dma.vmem_to_hbm [thread:$0]  %s1764, 2048, %s1762, %s1750, 128, 128, 8
        $region80: #{tpu_custom_call.1} parent=75 // pred_fallthru
          _
      $region76: #{tpu_custom_call.1} parent=5 // pred_fallthru
        _
      %p1770 = scmp.le.s32.totalorder 2, %s23
      // Predicated region
      $region81: #{tpu_custom_call.1} parent=5 // pred_check
        %p1771 = pneg %p1770
      $region82: #{tpu_custom_call.1} parent=5 // pred_check_branch
        %1773 = sbr.rel (%p1771) target = $region84
      $region83: #{tpu_custom_call.1} parent=5 // pred_region
        %s1774 = ssub.s32 %s23, 2
        // Predicated region
        $region85: #{tpu_custom_call.1} parent=83 // pred_check
          %p1775 = pneg %p356
        $region86: #{tpu_custom_call.1} parent=83 // pred_check_branch
          %1777 = sbr.rel (%p1775) target = $region88
        $region87: #{tpu_custom_call.1} parent=83 // pred_region
          %s1778 = sand.u32 %s341, 1
          %s1779 = scalar_lea.sflag [#allocation3], %s1778
          %s1780 = sand.u32 %s341, 1
          %s1781 = smul.addr %s1780, 128
          %s1782 = scalar_lea.vmem [#allocation2], %s1781
          %1783 = dma.done %s1779, 2048
        $region88: #{tpu_custom_call.1} parent=83 // pred_fallthru
          _
      $region84: #{tpu_custom_call.1} parent=5 // pred_fallthru
        _
    $region6: #{tpu_custom_call.1} parent=1 // loop_footer
      %s27 = sadd.s32 1, %s23
    $region7: #{tpu_custom_call.1} parent=1 // loop_footer_branch
      %22 = sbr.rel target = $region3
    $region8: #{tpu_custom_call.1} parent=1 // loop_exit
      _
    %1784 = vsyncpa [#allocation3], 1
    %s1785 = scalar_lea.sflag [#allocation3], 1
    %1786 = vsyncpa %s1785, 1

</llo_original>
